<compile_context>
chip_gen: v7x
topology: tpu7x:2x2x1
jax: 0.10.0
libtpu: 0.0.40
codegen_flags: <defaults>
</compile_context>

<pallas_src>
import functools

import jax
import jax.numpy as jnp
import numpy as np
from jax.experimental import pallas as pl
from jax.experimental.pallas import tpu as pltpu


def _cpn_lstm_seq_kernel(xn_ref, wu_ref, fcw_ref, vec_ref, slab_ref,
                         h_sc, c_sc, *, in_dim, hidden, out_dim,
                         k_pad, chunk, noisy_out_count, batch_tile):
  H = hidden
  t = pl.program_id(1)

  xn = xn_ref[...]                      # (Bt, in_dim + out_dim)  streamed
  vec = vec_ref[...]                    # (Bt, 6H + out_dim)      resident

  # Initialize the carried LSTM state at t == 0 (re-runs for every new batch
  # tile because the time axis is the innermost grid axis).
  @pl.when(t == 0)
  def _():
    h_sc[...] = vec[:, 4 * H:5 * H]
    c_sc[...] = vec[:, 5 * H:6 * H]

  x = xn[:, :in_dim]                    # (Bt, in_dim)
  h = h_sc[...]                         # (Bt, H) carried in VMEM
  xh = jnp.concatenate([x, h], axis=1)  # (Bt, in_dim + H)
  if k_pad > in_dim + H:
    xh = jnp.concatenate(
        [xh, jnp.zeros((batch_tile, k_pad - (in_dim + H)), jnp.float32)],
        axis=1)

  # gates[b, g] = bias[b, g] + sum_k xh[b, k] * WU[b, k, g]
  # VPU multiply + XLU sublane reduce, accumulated chunk-by-chunk over k so the
  # live intermediate is only ~(Bt*chunk*4H/1024) vregs; the serial dependence
  # through `gates` keeps the live set bounded (no VMEM spills at larger H).
  gates = vec[:, :4 * H]                # bias, (Bt, 4H), lane-aligned slice
  for kc in range(k_pad // chunk):
    lo = kc * chunk
    wu_c = wu_ref[:, lo:lo + chunk, :].astype(jnp.float32)   # (Bt, ch, 4H)
    xh_c = xh[:, lo:lo + chunk]                              # (Bt, ch)
    gates = gates + jnp.sum(xh_c[:, :, None] * wu_c, axis=1)

  # One full-width EUP sigmoid pass (the wasted sigmoid of the g-quarter is
  # only Bt*H elements -- cheaper than three sliced EUP calls), tanh on g.
  sg = jax.nn.sigmoid(gates)
  i_t = sg[:, 0 * H:1 * H]
  f_t = sg[:, 1 * H:2 * H]
  o_t = sg[:, 3 * H:4 * H]
  g_t = jnp.tanh(gates[:, 2 * H:3 * H])

  c_new = f_t * c_sc[...] + i_t * g_t
  h_new = o_t * jnp.tanh(c_new)
  c_sc[...] = c_new
  h_sc[...] = h_new
  act = jnp.tanh(h_new)                 # activation_func = Tanh

  # Readout in fc_w's native (Bt, out_dim, H) layout (no wrapper transpose):
  #   out[b, o] = sum_h fc_w[b, o, h] * act[b, h] + fc_b[b, o]
  fc_b = vec[:, 6 * H:6 * H + out_dim]
  out = jnp.sum(fcw_ref[...].astype(jnp.float32) * act[:, None, :],
                axis=2) + fc_b

  # out[:noisy_out_count, :] = white noise (overwrite, as in the PyTorch
  # module).  Global row index => correct under batch tiling; statically
  # skipped when no rows are noisy.
  if noisy_out_count > 0:
    noise = xn[:, in_dim:in_dim + out_dim]
    rows = (pl.program_id(0) * batch_tile
            + jax.lax.broadcasted_iota(jnp.int32, (batch_tile, out_dim), 0))
    out = jnp.where(rows < noisy_out_count, noise, out)

  # Single lane-dense store: [out | h | c | zero pad] -> (Bt, 128*k) slab.
  payload = jnp.concatenate([out, h_new, c_new], axis=1)
  pad = slab_ref.shape[-1] - payload.shape[-1]
  if pad > 0:
    payload = jnp.concatenate(
        [payload, jnp.zeros((batch_tile, pad), jnp.float32)], axis=1)
  slab_ref[...] = payload


def cpn_noisey_lstm_forward(x_seq, h0, c0, W, U, bias, fc_w, fc_b, noise_seq,
                            *, white_noise_pct=0.3, batch_tile=None,
                            weight_dtype=jnp.bfloat16):
  """Runs the noisy-LSTM collection over a sequence of timesteps.

  x_seq:     (T, B, in_dim)  -- a single step (B, in_dim) is also accepted
  noise_seq: (T, B, out_dim) -- per-step white noise overwriting the first rows
  Returns (out_seq (T, B, out_dim), h_T (B, H), c_T (B, H)).
  """
  single_step = (x_seq.ndim == 2)
  if single_step:
    x_seq = x_seq[None]
    noise_seq = noise_seq[None]
  T, B, in_dim = x_seq.shape
  H = h0.shape[-1]
  out_dim = fc_b.shape[-1]
  noisy_out_count = int(B * white_noise_pct)

  if batch_tile is None:
    if B <= 8 or B % 8 != 0:
      batch_tile = B
    else:
      # Larger tiles amortize the ~0.35us/step grid overhead for big batches.
      # Sweep 32..256 for the last few %.  v7x: keep B // batch_tile >= 2 so
      # both TensorCores get work, and budget tiles against its 64 MiB VMEM
      # (set vmem_limit_bytes explicitly if raising this).
      batch_tile = 8
      for cand in (64, 32, 16, 8):
        if B % cand == 0:
          batch_tile = cand
          break
  assert B % batch_tile == 0

  f32 = jnp.float32
  # Chunk of the contraction axis sized so each partial product is ~8 vregs.
  chunk = max(1, min(8, (8 * 1024) // max(1, batch_tile * 4 * H)))
  K = in_dim + H
  k_pad = pl.cdiv(K, chunk) * chunk

  # ---- Pack operands (lane-dense, few DMAs) ----
  WU = jnp.concatenate([W.astype(f32), U.astype(f32)], axis=1)   # (B, K, 4H)
  if k_pad > K:
    WU = jnp.concatenate([WU, jnp.zeros((B, k_pad - K, 4 * H), f32)], axis=1)
  WU = WU.astype(weight_dtype)                                   # bf16 stream
  fcw = fc_w.astype(weight_dtype)
  vec = jnp.concatenate([bias.astype(f32), h0.astype(f32), c0.astype(f32),
                         fc_b.astype(f32)], axis=1)              # (B, 6H+od)
  xn = jnp.concatenate([x_seq.astype(f32), noise_seq.astype(f32)], axis=-1)

  xn_w = in_dim + out_dim
  vec_w = 6 * H + out_dim
  P = 128 * pl.cdiv(out_dim + 2 * H, 128)    # lane-dense output slab width

  kernel = functools.partial(
      _cpn_lstm_seq_kernel, in_dim=in_dim, hidden=H, out_dim=out_dim,
      k_pad=k_pad, chunk=chunk, noisy_out_count=noisy_out_count,
      batch_tile=batch_tile)

  grid = (B // batch_tile, T)   # time axis last => innermost, carries h/c

  slab = pl.pallas_call(
      kernel,
      out_shape=jax.ShapeDtypeStruct((T, B, P), f32),
      grid_spec=pltpu.PrefetchScalarGridSpec(
          num_scalar_prefetch=0,
          grid=grid,
          in_specs=[
              # Streamed per (t, b): packed [x_t | noise].
              pl.BlockSpec((None, batch_tile, xn_w), lambda b, t: (t, b, 0)),
              # VMEM-resident across the whole time loop (block index constant
              # in t => no re-DMA after the first step of each batch tile).
              pl.BlockSpec((batch_tile, k_pad, 4 * H), lambda b, t: (b, 0, 0)),
              pl.BlockSpec((batch_tile, out_dim, H), lambda b, t: (b, 0, 0)),
              pl.BlockSpec((batch_tile, vec_w), lambda b, t: (b, 0)),
          ],
          out_specs=pl.BlockSpec((None, batch_tile, P),
                                 lambda b, t: (t, b, 0)),
          scratch_shapes=[pltpu.VMEM((batch_tile, H), f32),   # h carry
                          pltpu.VMEM((batch_tile, H), f32)],  # c carry
      ),
      compiler_params=pltpu.CompilerParams(
          dimension_semantics=("parallel", "arbitrary")),
  )(xn, WU, fcw, vec)

  out_seq = slab[:, :, :out_dim]
  h_T = slab[-1, :, out_dim:out_dim + H]
  c_T = slab[-1, :, out_dim + H:out_dim + 2 * H]
  if single_step:
    out_seq = out_seq[0]
  return out_seq, h_T, c_T


def _reference_forward_seq(x_seq, h0, c0, W, U, bias, fc_w, fc_b, noise_seq,
                           *, white_noise_pct=0.3):
  """Pure-JAX reference: the PyTorch forward applied step-by-step."""
  B = x_seq.shape[1]
  H = h0.shape[-1]
  nb = int(B * white_noise_pct)

  def step(carry, xs):
    h, c = carry
    x_t, noise_t = xs
    gates = (jnp.einsum('bi,bio->bo', x_t, W)
             + jnp.einsum('bh,bho->bo', h, U) + bias)
    i_t = jax.nn.sigmoid(gates[:, :H])
    f_t = jax.nn.sigmoid(gates[:, H:2 * H])
    g_t = jnp.tanh(gates[:, 2 * H:3 * H])
    o_t = jax.nn.sigmoid(gates[:, 3 * H:])
    c = f_t * c + i_t * g_t
    h = o_t * jnp.tanh(c)
    act = jnp.tanh(h)
    out = jnp.einsum('boh,bh->bo', fc_w, act) + fc_b
    if nb > 0:
      out = out.at[:nb, :].set(noise_t[:nb, :])
    return (h, c), out

  (hT, cT), outs = jax.lax.scan(step, (h0, c0), (x_seq, noise_seq))
  return outs, hT, cT


def _setup_params(key, *, batch_size, in_dim, num_neurons, out_dim,
                  noisey_pct=0.9, noise_var=0.7):
  """Deterministic emulation of CPNNoiseyLSTMCollection.setup()."""
  H = num_neurons
  noisey_cnt = int(batch_size * noisey_pct)
  ks = jax.random.split(key, 10)

  base_W = jax.random.normal(ks[0], (in_dim, 4 * H), jnp.float32) * 0.1
  base_U = jax.random.normal(ks[1], (H, 4 * H), jnp.float32) * 0.1
  base_bias = jax.random.normal(ks[2], (4 * H,), jnp.float32) * 0.1
  base_fc_w = jax.random.normal(ks[3], (out_dim, H), jnp.float32) * 0.1
  base_fc_b = jax.random.normal(ks[4], (out_dim,), jnp.float32) * 0.1

  def noisify(base, bcast_shape, nkey):
    rep = jnp.broadcast_to(base, bcast_shape).astype(jnp.float32)
    stdev = jnp.std(rep[:noisey_cnt]) * noise_var
    noise = stdev * jax.random.normal(nkey, (noisey_cnt,) + bcast_shape[1:],
                                      jnp.float32)
    return rep.at[:noisey_cnt].add(noise)

  W = noisify(base_W, (batch_size, in_dim, 4 * H), ks[5])
  U = noisify(base_U, (batch_size, H, 4 * H), ks[6])
  bias = noisify(base_bias, (batch_size, 4 * H), ks[7])
  fc_w = noisify(base_fc_w, (batch_size, out_dim, H), ks[8])
  fc_b = noisify(base_fc_b, (batch_size, out_dim), ks[9])
  return W, U, bias, fc_w, fc_b


if __name__ == "__main__":
  B, IN_DIM, H, OUT_DIM, T = 8, 8, 32, 4, 6
  WHITE_NOISE_PCT, WHITE_NOISE_VAR = 0.3, 2.0

  key = jax.random.PRNGKey(0)
  k_param, k_x, k_noise = jax.random.split(key, 3)

  W, U, bias, fc_w, fc_b = _setup_params(
      k_param, batch_size=B, in_dim=IN_DIM, num_neurons=H, out_dim=OUT_DIM)

  x_seq = jax.random.normal(k_x, (T, B, IN_DIM), jnp.float32)
  h0 = jnp.zeros((B, H), jnp.float32)   # first call: ht/ct start at zero
  c0 = jnp.zeros((B, H), jnp.float32)
  # Per-step white noise that overwrites the first int(B * pct) output rows
  # (rows past the cutoff are unused); generated host-side like torch.rand.
  noise_seq = WHITE_NOISE_VAR * (
      jax.random.uniform(k_noise, (T, B, OUT_DIM), jnp.float32) - 0.5)

  out_seq, h_T, c_T = cpn_noisey_lstm_forward(
      x_seq, h0, c0, W, U, bias, fc_w, fc_b, noise_seq,
      white_noise_pct=WHITE_NOISE_PCT, weight_dtype=jnp.bfloat16)
  jax.block_until_ready((out_seq, h_T, c_T))

  # Reference uses the same bf16-rounded weights the kernel streams (all math
  # in f32), so the comparison isolates kernel correctness from quantization.
  Wq = W.astype(jnp.bfloat16).astype(jnp.float32)
  Uq = U.astype(jnp.bfloat16).astype(jnp.float32)
  fcwq = fc_w.astype(jnp.bfloat16).astype(jnp.float32)
  out_ref, h_ref, c_ref = _reference_forward_seq(
      x_seq, h0, c0, Wq, Uq, bias, fcwq, fc_b, noise_seq,
      white_noise_pct=WHITE_NOISE_PCT)

  np.testing.assert_allclose(np.asarray(out_seq), np.asarray(out_ref),
                             rtol=1e-4, atol=1e-5)
  np.testing.assert_allclose(np.asarray(h_T), np.asarray(h_ref),
                             rtol=1e-4, atol=1e-5)
  np.testing.assert_allclose(np.asarray(c_T), np.asarray(c_ref),
                             rtol=1e-4, atol=1e-5)

  print("KERNEL_OK")
</pallas_src>

<mosaic_0001>
module attributes {stable_mosaic.version = 11 : i64} {
  func.func @_cpn_lstm_seq_kernel(%arg0: i32, %arg1: i32, %arg2: memref<1x8x12xf32, #tpu.memory_space<vmem>>, %arg3: memref<8x40x128xbf16, #tpu.memory_space<vmem>>, %arg4: memref<8x4x32xbf16, #tpu.memory_space<vmem>>, %arg5: memref<8x196xf32, #tpu.memory_space<vmem>>, %arg6: memref<1x8x128xf32, #tpu.memory_space<vmem>>, %arg7: memref<8x32xf32, #tpu.memory_space<vmem>>, %arg8: memref<8x32xf32, #tpu.memory_space<vmem>>) attributes {dimension_semantics = [#tpu.dimension_semantics<parallel>, #tpu.dimension_semantics<arbitrary>], iteration_bounds = array<i64: 1, 6>, scalar_prefetch = 0 : i64, scratch_operands = 2 : i64, tpu.core_type = #tpu.core_type<tc>, window_params = [{transform_indices = @transform_0, window_bounds = array<i64: 1, 8, 12>}, {transform_indices = @transform_1, window_bounds = array<i64: 8, 40, 128>}, {transform_indices = @transform_2, window_bounds = array<i64: 8, 4, 32>}, {transform_indices = @transform_3, window_bounds = array<i64: 8, 196>}, {transform_indices = @transform_4, window_bounds = array<i64: 1, 8, 128>}]} {
    %c0 = arith.constant 0 : index
    %c0_0 = arith.constant 0 : index
    %c0_1 = arith.constant 0 : index
    %0 = vector.load %arg2[%c0, %c0_0, %c0_1] : memref<1x8x12xf32, #tpu.memory_space<vmem>>, vector<1x8x12xf32>
    %1 = vector.shape_cast %0 : vector<1x8x12xf32> to vector<8x12xf32>
    %c0_2 = arith.constant 0 : index
    %c0_3 = arith.constant 0 : index
    %2 = vector.load %arg5[%c0_2, %c0_3] : memref<8x196xf32, #tpu.memory_space<vmem>>, vector<8x196xf32>
    %c0_i32 = arith.constant 0 : i32
    %3 = arith.cmpi eq, %arg1, %c0_i32 : i32
    %4 = arith.extui %3 : i1 to i32
    %c0_i32_4 = arith.constant 0 : i32
    %5 = arith.cmpi ne, %4, %c0_i32_4 : i32
    scf.if %5 {
      %91 = vector.extract_strided_slice %2 {offsets = [0, 128], sizes = [8, 32], strides = [1, 1]} : vector<8x196xf32> to vector<8x32xf32>
      %c0_37 = arith.constant 0 : index
      %c0_38 = arith.constant 0 : index
      %92 = vector.load %arg7[%c0_37, %c0_38] : memref<8x32xf32, #tpu.memory_space<vmem>>, vector<8x32xf32>
      tpu.vector_store %arg7[%c0_37, %c0_38], %91 {strides = array<i32>} : memref<8x32xf32, #tpu.memory_space<vmem>>, vector<8x32xf32>,
      %93 = vector.extract_strided_slice %2 {offsets = [0, 160], sizes = [8, 32], strides = [1, 1]} : vector<8x196xf32> to vector<8x32xf32>
      %c0_39 = arith.constant 0 : index
      %c0_40 = arith.constant 0 : index
      %94 = vector.load %arg8[%c0_39, %c0_40] : memref<8x32xf32, #tpu.memory_space<vmem>>, vector<8x32xf32>
      tpu.vector_store %arg8[%c0_39, %c0_40], %93 {strides = array<i32>} : memref<8x32xf32, #tpu.memory_space<vmem>>, vector<8x32xf32>,
    } else {
    }
    %6 = vector.extract_strided_slice %1 {offsets = [0, 0], sizes = [8, 8], strides = [1, 1]} : vector<8x12xf32> to vector<8x8xf32>
    %c0_5 = arith.constant 0 : index
    %c0_6 = arith.constant 0 : index
    %7 = vector.load %arg7[%c0_5, %c0_6] : memref<8x32xf32, #tpu.memory_space<vmem>>, vector<8x32xf32>
    %8 = tpu.concatenate %6, %7 in 1 : vector<8x8xf32>, vector<8x32xf32> -> vector<8x40xf32>
    %9 = vector.extract_strided_slice %2 {offsets = [0, 0], sizes = [8, 128], strides = [1, 1]} : vector<8x196xf32> to vector<8x128xf32>
    %c0_7 = arith.constant 0 : index
    %c0_8 = arith.constant 0 : index
    %c0_9 = arith.constant 0 : index
    %10 = vector.load %arg3[%c0_7, %c0_8, %c0_9] : memref<8x40x128xbf16, #tpu.memory_space<vmem>>, vector<8x8x128xbf16>
    %11 = arith.extf %10 : vector<8x8x128xbf16> to vector<8x8x128xf32>
    %12 = vector.extract_strided_slice %8 {offsets = [0, 0], sizes = [8, 8], strides = [1, 1]} : vector<8x40xf32> to vector<8x8xf32>
    %13 = vector.shape_cast %12 : vector<8x8xf32> to vector<8x8x1xf32>
    %14 = vector.broadcast %13 : vector<8x8x1xf32> to vector<8x8x128xf32>
    %15 = arith.mulf %14, %11 : vector<8x8x128xf32>
    %cst = arith.constant dense<0.000000e+00> : vector<8x128xf32>
    %16 = vector.multi_reduction <add>, %15, %cst [1] : vector<8x8x128xf32> to vector<8x128xf32>
    %17 = arith.addf %9, %16 : vector<8x128xf32>
    %c0_10 = arith.constant 0 : index
    %c8 = arith.constant 8 : index
    %c0_11 = arith.constant 0 : index
    %18 = vector.load %arg3[%c0_10, %c8, %c0_11] : memref<8x40x128xbf16, #tpu.memory_space<vmem>>, vector<8x8x128xbf16>
    %19 = arith.extf %18 : vector<8x8x128xbf16> to vector<8x8x128xf32>
    %20 = vector.extract_strided_slice %8 {offsets = [0, 8], sizes = [8, 8], strides = [1, 1]} : vector<8x40xf32> to vector<8x8xf32>
    %21 = vector.shape_cast %20 : vector<8x8xf32> to vector<8x8x1xf32>
    %22 = vector.broadcast %21 : vector<8x8x1xf32> to vector<8x8x128xf32>
    %23 = arith.mulf %22, %19 : vector<8x8x128xf32>
    %cst_12 = arith.constant dense<0.000000e+00> : vector<8x128xf32>
    %24 = vector.multi_reduction <add>, %23, %cst_12 [1] : vector<8x8x128xf32> to vector<8x128xf32>
    %25 = arith.addf %17, %24 : vector<8x128xf32>
    %c0_13 = arith.constant 0 : index
    %c16 = arith.constant 16 : index
    %c0_14 = arith.constant 0 : index
    %26 = vector.load %arg3[%c0_13, %c16, %c0_14] : memref<8x40x128xbf16, #tpu.memory_space<vmem>>, vector<8x8x128xbf16>
    %27 = arith.extf %26 : vector<8x8x128xbf16> to vector<8x8x128xf32>
    %28 = vector.extract_strided_slice %8 {offsets = [0, 16], sizes = [8, 8], strides = [1, 1]} : vector<8x40xf32> to vector<8x8xf32>
    %29 = vector.shape_cast %28 : vector<8x8xf32> to vector<8x8x1xf32>
    %30 = vector.broadcast %29 : vector<8x8x1xf32> to vector<8x8x128xf32>
    %31 = arith.mulf %30, %27 : vector<8x8x128xf32>
    %cst_15 = arith.constant dense<0.000000e+00> : vector<8x128xf32>
    %32 = vector.multi_reduction <add>, %31, %cst_15 [1] : vector<8x8x128xf32> to vector<8x128xf32>
    %33 = arith.addf %25, %32 : vector<8x128xf32>
    %c0_16 = arith.constant 0 : index
    %c24 = arith.constant 24 : index
    %c0_17 = arith.constant 0 : index
    %34 = vector.load %arg3[%c0_16, %c24, %c0_17] : memref<8x40x128xbf16, #tpu.memory_space<vmem>>, vector<8x8x128xbf16>
    %35 = arith.extf %34 : vector<8x8x128xbf16> to vector<8x8x128xf32>
    %36 = vector.extract_strided_slice %8 {offsets = [0, 24], sizes = [8, 8], strides = [1, 1]} : vector<8x40xf32> to vector<8x8xf32>
    %37 = vector.shape_cast %36 : vector<8x8xf32> to vector<8x8x1xf32>
    %38 = vector.broadcast %37 : vector<8x8x1xf32> to vector<8x8x128xf32>
    %39 = arith.mulf %38, %35 : vector<8x8x128xf32>
    %cst_18 = arith.constant dense<0.000000e+00> : vector<8x128xf32>
    %40 = vector.multi_reduction <add>, %39, %cst_18 [1] : vector<8x8x128xf32> to vector<8x128xf32>
    %41 = arith.addf %33, %40 : vector<8x128xf32>
    %c0_19 = arith.constant 0 : index
    %c32 = arith.constant 32 : index
    %c0_20 = arith.constant 0 : index
    %42 = vector.load %arg3[%c0_19, %c32, %c0_20] : memref<8x40x128xbf16, #tpu.memory_space<vmem>>, vector<8x8x128xbf16>
    %43 = arith.extf %42 : vector<8x8x128xbf16> to vector<8x8x128xf32>
    %44 = vector.extract_strided_slice %8 {offsets = [0, 32], sizes = [8, 8], strides = [1, 1]} : vector<8x40xf32> to vector<8x8xf32>
    %45 = vector.shape_cast %44 : vector<8x8xf32> to vector<8x8x1xf32>
    %46 = vector.broadcast %45 : vector<8x8x1xf32> to vector<8x8x128xf32>
    %47 = arith.mulf %46, %43 : vector<8x8x128xf32>
    %cst_21 = arith.constant dense<0.000000e+00> : vector<8x128xf32>
    %48 = vector.multi_reduction <add>, %47, %cst_21 [1] : vector<8x8x128xf32> to vector<8x128xf32>
    %49 = arith.addf %41, %48 : vector<8x128xf32>
    %50 = arith.negf %49 : vector<8x128xf32>
    %51 = math.exp %50 : vector<8x128xf32>
    %cst_22 = arith.constant 1.000000e+00 : f32
    %52 = vector.broadcast %cst_22 : f32 to vector<8x128xf32>
    %53 = arith.addf %52, %51 : vector<8x128xf32>
    %54 = arith.divf %52, %53 : vector<8x128xf32>
    %55 = vector.extract_strided_slice %54 {offsets = [0, 0], sizes = [8, 32], strides = [1, 1]} : vector<8x128xf32> to vector<8x32xf32>
    %56 = vector.extract_strided_slice %54 {offsets = [0, 32], sizes = [8, 32], strides = [1, 1]} : vector<8x128xf32> to vector<8x32xf32>
    %57 = vector.extract_strided_slice %54 {offsets = [0, 96], sizes = [8, 32], strides = [1, 1]} : vector<8x128xf32> to vector<8x32xf32>
    %58 = vector.extract_strided_slice %49 {offsets = [0, 64], sizes = [8, 32], strides = [1, 1]} : vector<8x128xf32> to vector<8x32xf32>
    %59 = math.tanh %58 : vector<8x32xf32>
    %c0_23 = arith.constant 0 : index
    %c0_24 = arith.constant 0 : index
    %60 = vector.load %arg8[%c0_23, %c0_24] : memref<8x32xf32, #tpu.memory_space<vmem>>, vector<8x32xf32>
    %61 = arith.mulf %56, %60 : vector<8x32xf32>
    %62 = arith.mulf %55, %59 : vector<8x32xf32>
    %63 = arith.addf %61, %62 : vector<8x32xf32>
    %64 = math.tanh %63 : vector<8x32xf32>
    %65 = arith.mulf %57, %64 : vector<8x32xf32>
    %c0_25 = arith.constant 0 : index
    %c0_26 = arith.constant 0 : index
    %66 = vector.load %arg8[%c0_25, %c0_26] : memref<8x32xf32, #tpu.memory_space<vmem>>, vector<8x32xf32>
    tpu.vector_store %arg8[%c0_25, %c0_26], %63 {strides = array<i32>} : memref<8x32xf32, #tpu.memory_space<vmem>>, vector<8x32xf32>,
    %c0_27 = arith.constant 0 : index
    %c0_28 = arith.constant 0 : index
    %67 = vector.load %arg7[%c0_27, %c0_28] : memref<8x32xf32, #tpu.memory_space<vmem>>, vector<8x32xf32>
    tpu.vector_store %arg7[%c0_27, %c0_28], %65 {strides = array<i32>} : memref<8x32xf32, #tpu.memory_space<vmem>>, vector<8x32xf32>,
    %68 = math.tanh %65 : vector<8x32xf32>
    %69 = vector.extract_strided_slice %2 {offsets = [0, 192], sizes = [8, 4], strides = [1, 1]} : vector<8x196xf32> to vector<8x4xf32>
    %c0_29 = arith.constant 0 : index
    %c0_30 = arith.constant 0 : index
    %c0_31 = arith.constant 0 : index
    %70 = vector.load %arg4[%c0_29, %c0_30, %c0_31] : memref<8x4x32xbf16, #tpu.memory_space<vmem>>, vector<8x4x32xbf16>
    %71 = arith.extf %70 : vector<8x4x32xbf16> to vector<8x4x32xf32>
    %72 = vector.shape_cast %68 : vector<8x32xf32> to vector<8x1x32xf32>
    %73 = vector.broadcast %72 : vector<8x1x32xf32> to vector<8x4x32xf32>
    %74 = arith.mulf %71, %73 : vector<8x4x32xf32>
    %cst_32 = arith.constant dense<0.000000e+00> : vector<8x4xf32>
    %75 = vector.multi_reduction <add>, %74, %cst_32 [2] : vector<8x4x32xf32> to vector<8x4xf32>
    %76 = arith.addf %75, %69 : vector<8x4xf32>
    %77 = vector.extract_strided_slice %1 {offsets = [0, 8], sizes = [8, 4], strides = [1, 1]} : vector<8x12xf32> to vector<8x4xf32>
    %c8_i32 = arith.constant 8 : i32
    %78 = arith.muli %arg0, %c8_i32 : i32
    %79 = tpu.iota {dimensions = array<i32: 0>} : vector<8x4xi32>
    %80 = vector.broadcast %78 : i32 to vector<8x4xi32>
    %81 = arith.addi %80, %79 : vector<8x4xi32>
    %c2_i32 = arith.constant 2 : i32
    %82 = vector.broadcast %c2_i32 : i32 to vector<8x4xi32>
    %83 = arith.cmpi slt, %81, %82 : vector<8x4xi32>
    %84 = arith.select %83, %77, %76 : vector<8x4xi1>, vector<8x4xf32>
    %85 = tpu.concatenate %84, %65, %63 in 1 : vector<8x4xf32>, vector<8x32xf32>, vector<8x32xf32> -> vector<8x68xf32>
    %cst_33 = arith.constant 0.000000e+00 : f32
    %86 = vector.broadcast %cst_33 : f32 to vector<8x60xf32>
    %87 = tpu.concatenate %85, %86 in 1 : vector<8x68xf32>, vector<8x60xf32> -> vector<8x128xf32>
    %c0_34 = arith.constant 0 : index
    %c0_35 = arith.constant 0 : index
    %c0_36 = arith.constant 0 : index
    %88 = vector.load %arg6[%c0_34, %c0_35, %c0_36] : memref<1x8x128xf32, #tpu.memory_space<vmem>>, vector<1x8x128xf32>
    %89 = vector.shape_cast %88 : vector<1x8x128xf32> to vector<8x128xf32>
    %90 = vector.shape_cast %87 : vector<8x128xf32> to vector<1x8x128xf32>
    tpu.vector_store %arg6[%c0_34, %c0_35, %c0_36], %90 {strides = array<i32>} : memref<1x8x128xf32, #tpu.memory_space<vmem>>, vector<1x8x128xf32>,
    return
  }
  func.func @transform_0(%arg0: i32, %arg1: i32) -> (i32, i32, i32) {
    %c0_i32 = arith.constant 0 : i32
    %c0_i32_0 = arith.constant 0 : i32
    return %arg1, %arg0, %c0_i32 : i32, i32, i32
  }
  func.func @transform_1(%arg0: i32, %arg1: i32) -> (i32, i32, i32) {
    %c0_i32 = arith.constant 0 : i32
    %c0_i32_0 = arith.constant 0 : i32
    %c0_i32_1 = arith.constant 0 : i32
    return %arg0, %c0_i32, %c0_i32_0 : i32, i32, i32
  }
  func.func @transform_2(%arg0: i32, %arg1: i32) -> (i32, i32, i32) {
    %c0_i32 = arith.constant 0 : i32
    %c0_i32_0 = arith.constant 0 : i32
    %c0_i32_1 = arith.constant 0 : i32
    return %arg0, %c0_i32, %c0_i32_0 : i32, i32, i32
  }
  func.func @transform_3(%arg0: i32, %arg1: i32) -> (i32, i32) {
    %c0_i32 = arith.constant 0 : i32
    %c0_i32_0 = arith.constant 0 : i32
    return %arg0, %c0_i32 : i32, i32
  }
  func.func @transform_4(%arg0: i32, %arg1: i32) -> (i32, i32, i32) {
    %c0_i32 = arith.constant 0 : i32
    %c0_i32_0 = arith.constant 0 : i32
    return %arg1, %arg0, %c0_i32 : i32, i32, i32
  }
}

</mosaic_0001>

<llo_original>
// kernel: tpu_custom_call.1
$region0: #{tpu_custom_call.1}
  #allocation0 [shape = 'u32[]', space=smem, size = 0x4, offset = 0x4, fixed_abs, tag = 'smem constant byte address 0x4 - core index']
  #allocation1 [shape = 'u32[144,128]{1,0:T(1,128)}', space=vmem, size = 0x12000, scoped, tag = 'internal scratch']
  #allocation2 [shape = 'f32[8,32]{1,0:T(8,128)}', space=vmem, size = 0x1000, scoped, tag = 'scratch operand']
  #allocation3 [shape = 'f32[8,32]{1,0:T(8,128)}', space=vmem, size = 0x1000, scoped, tag = 'scratch operand']
  %s0 = inlined_call_operand.hbm [shape: f32[6,8,12], index: 0, kind: input, shape index: {}]
  %s1 = inlined_call_operand.hbm [shape: bf16[8,40,128], index: 1, kind: input, shape index: {}]
  %s2 = inlined_call_operand.hbm [shape: bf16[8,4,32], index: 2, kind: input, shape index: {}]
  %s3 = inlined_call_operand.hbm [shape: f32[8,196], index: 3, kind: input, shape index: {}]
  %s4 = inlined_call_operand.hbm [shape: f32[6,8,128], index: 4, kind: output, shape index: {}]
  %s5 = sld [smem:[#allocation0]]
  $region69: #{tpu_custom_call.1} parent=0
    _
  %s7 = ssub.s32 1, %s5
  %s8 = scalar_select 0, %s7, %s5
  $region1: #{tpu_custom_call.1} parent=0
    #allocation4 [shape = 'u8[8192]{0}', space=vmem, size = 0x2000, scoped, tag = 'input window, operand 0']
    #allocation5 [shape = 's32[2]{0}', space=sflag, size = 0x8, scoped, tag = 'scoped memory for tpu_custom_call.1']
    #allocation6 [shape = 's32[2]{0}', space=sflag, size = 0x8, scoped, tag = 'scoped memory for tpu_custom_call.1']
    #allocation7 [shape = 'u8[81920]{0}', space=vmem, size = 0x14000, scoped, tag = 'input window, operand 1, single buffered']
    #allocation8 [shape = 's32[1]{0}', space=sflag, size = 0x4, scoped, tag = 'scoped memory for tpu_custom_call.1']
    #allocation9 [shape = 'u8[8192]{0}', space=vmem, size = 0x2000, scoped, tag = 'input window, operand 2, single buffered']
    #allocation10 [shape = 'u8[8192]{0}', space=vmem, size = 0x2000, scoped, tag = 'input window, operand 3, single buffered']
    #allocation11 [shape = 's32[1]{0}', space=sflag, size = 0x4, scoped, tag = 'scoped memory for tpu_custom_call.1']
    #allocation12 [shape = 'u8[8192]{0}', space=vmem, size = 0x2000, scoped, tag = 'output window, operand 0']
    %9 = vsyncpa [#allocation5], 0
    %s10 = scalar_lea.sflag [#allocation5], 1
    %11 = vsyncpa %s10, 0
    %12 = vsyncpa [#allocation8], 0
    %13 = vsyncpa [#allocation11], 0
    %14 = vsyncpa [#allocation6], 0
    %s15 = scalar_lea.sflag [#allocation6], 1
    %16 = vsyncpa %s15, 0
    loop: start=0, step=1, limit=8
    $region2: #{tpu_custom_call.1} parent=1 // loop_pre_header
      _
    $region3: #{tpu_custom_call.1} parent=1 // loop_header
      %s18 = sphi 0, %s22
      %p19 = scmp.ge.s32.totalorder %s18, 8
      %s25 = sphi 0, %s37
      %s26 = sphi 0, %s33
      %s27 = sphi 0, %s25
      %s28 = sphi 0, %s26
      %s29 = sphi 0, %s27
      %s30 = sphi 0, %s28
      %s42 = sphi 0, %s44
      %s45 = sphi 0, %s42
      %s46 = sphi 0, %s45
      %s62 = sphi 0, %s46
      %s68 = sphi 0, %s70
      %s71 = sphi 0, %s68
      %s72 = sphi 0, %s71
      %s88 = sphi 0, %s72
      %s94 = sphi 0, %s96
      %s97 = sphi 0, %s94
      %s98 = sphi 0, %s97
      %s114 = sphi 0, %s98
      %s120 = sphi 0, %s122
      %s123 = sphi 0, %s120
      %s124 = sphi 0, %s123
      %s140 = sphi 0, %s124
      %s148 = sphi 0, %s150
      %s151 = sphi 0, %s148
      %s152 = sphi 0, %s151
      %s168 = sphi 0, %s152
    $region4: #{tpu_custom_call.1} parent=1 // loop_header_branch
      %21 = sbr.rel (%p19) target = $region8
    $region5: #{tpu_custom_call.1} parent=1 // loop_body
      %s23 = ssub.s32 %s18, 1
      %s24 = ssub.s32 %s18, 2
      %s31 = sadd.s32 1, %s26
      %p32 = scmp.ge.s32.totalorder %s31, 6
      %s33 = scalar_select %p32, 0, %s31
      %s34 = sadd.s32 1, %s25
      %s35 = scalar_select %p32, %s34, %s25
      %p36 = scmp.ge.s32.totalorder %s35, 1
      %s37 = scalar_select %p36, 0, %s35
      %s38 = ssub.s32 %s26, %s33
      %s39 = ssub.s32 %s25, %s37
      %s40 = sor.u32 %s38, %s39
      %p41 = scmp.eq.s32.totalorder %s40, 0
      %s43 = sadd.s32 %s42, 1
      %s44 = scalar_select %p41, %s42, %s43
      %p47 = pneg %p41
      %p48 = scmp.eq.s32.totalorder %s18, 5
      %p49 = por %p47, %p48
      %p50 = scmp.ne.s32.totalorder %s42, %s45
      %p51 = scmp.eq.s32.totalorder %s18, 0
      %p52 = por %p50, %p51
      %p53 = scmp.ne.s32.totalorder %s42, %s45
      %p54 = scmp.eq.s32.totalorder %s23, 5
      %p55 = por %p53, %p54
      %p56 = scmp.ne.s32.totalorder %s45, %s46
      %p57 = scmp.eq.s32.totalorder %s23, 0
      %p58 = por %p56, %p57
      %p59 = scmp.ne.s32.totalorder %s45, %s46
      %p60 = scmp.eq.s32.totalorder %s24, 5
      %p61 = por %p59, %p60
      %p63 = scmp.ne.s32.totalorder %s46, %s62
      %p64 = scmp.eq.s32.totalorder %s24, 0
      %p65 = por %p63, %p64
      %s66 = ssub.s32 %s25, %s37
      %p67 = scmp.eq.s32.totalorder %s66, 0
      %s69 = sadd.s32 %s68, 1
      %s70 = scalar_select %p67, %s68, %s69
      %p73 = pneg %p67
      %p74 = scmp.eq.s32.totalorder %s18, 5
      %p75 = por %p73, %p74
      %p76 = scmp.ne.s32.totalorder %s68, %s71
      %p77 = scmp.eq.s32.totalorder %s18, 0
      %p78 = por %p76, %p77
      %p79 = scmp.ne.s32.totalorder %s68, %s71
      %p80 = scmp.eq.s32.totalorder %s23, 5
      %p81 = por %p79, %p80
      %p82 = scmp.ne.s32.totalorder %s71, %s72
      %p83 = scmp.eq.s32.totalorder %s23, 0
      %p84 = por %p82, %p83
      %p85 = scmp.ne.s32.totalorder %s71, %s72
      %p86 = scmp.eq.s32.totalorder %s24, 5
      %p87 = por %p85, %p86
      %p89 = scmp.ne.s32.totalorder %s72, %s88
      %p90 = scmp.eq.s32.totalorder %s24, 0
      %p91 = por %p89, %p90
      %s92 = ssub.s32 %s25, %s37
      %p93 = scmp.eq.s32.totalorder %s92, 0
      %s95 = sadd.s32 %s94, 1
      %s96 = scalar_select %p93, %s94, %s95
      %p99 = pneg %p93
      %p100 = scmp.eq.s32.totalorder %s18, 5
      %p101 = por %p99, %p100
      %p102 = scmp.ne.s32.totalorder %s94, %s97
      %p103 = scmp.eq.s32.totalorder %s18, 0
      %p104 = por %p102, %p103
      %p105 = scmp.ne.s32.totalorder %s94, %s97
      %p106 = scmp.eq.s32.totalorder %s23, 5
      %p107 = por %p105, %p106
      %p108 = scmp.ne.s32.totalorder %s97, %s98
      %p109 = scmp.eq.s32.totalorder %s23, 0
      %p110 = por %p108, %p109
      %p111 = scmp.ne.s32.totalorder %s97, %s98
      %p112 = scmp.eq.s32.totalorder %s24, 5
      %p113 = por %p111, %p112
      %p115 = scmp.ne.s32.totalorder %s98, %s114
      %p116 = scmp.eq.s32.totalorder %s24, 0
      %p117 = por %p115, %p116
      %s118 = ssub.s32 %s25, %s37
      %p119 = scmp.eq.s32.totalorder %s118, 0
      %s121 = sadd.s32 %s120, 1
      %s122 = scalar_select %p119, %s120, %s121
      %p125 = pneg %p119
      %p126 = scmp.eq.s32.totalorder %s18, 5
      %p127 = por %p125, %p126
      %p128 = scmp.ne.s32.totalorder %s120, %s123
      %p129 = scmp.eq.s32.totalorder %s18, 0
      %p130 = por %p128, %p129
      %p131 = scmp.ne.s32.totalorder %s120, %s123
      %p132 = scmp.eq.s32.totalorder %s23, 5
      %p133 = por %p131, %p132
      %p134 = scmp.ne.s32.totalorder %s123, %s124
      %p135 = scmp.eq.s32.totalorder %s23, 0
      %p136 = por %p134, %p135
      %p137 = scmp.ne.s32.totalorder %s123, %s124
      %p138 = scmp.eq.s32.totalorder %s24, 5
      %p139 = por %p137, %p138
      %p141 = scmp.ne.s32.totalorder %s124, %s140
      %p142 = scmp.eq.s32.totalorder %s24, 0
      %p143 = por %p141, %p142
      %s144 = ssub.s32 %s26, %s33
      %s145 = ssub.s32 %s25, %s37
      %s146 = sor.u32 %s144, %s145
      %p147 = scmp.eq.s32.totalorder %s146, 0
      %s149 = sadd.s32 %s148, 1
      %s150 = scalar_select %p147, %s148, %s149
      %p153 = pneg %p147
      %p154 = scmp.eq.s32.totalorder %s18, 5
      %p155 = por %p153, %p154
      %p156 = scmp.ne.s32.totalorder %s148, %s151
      %p157 = scmp.eq.s32.totalorder %s18, 0
      %p158 = por %p156, %p157
      %p159 = scmp.ne.s32.totalorder %s148, %s151
      %p160 = scmp.eq.s32.totalorder %s23, 5
      %p161 = por %p159, %p160
      %p162 = scmp.ne.s32.totalorder %s151, %s152
      %p163 = scmp.eq.s32.totalorder %s23, 0
      %p164 = por %p162, %p163
      %p165 = scmp.ne.s32.totalorder %s151, %s152
      %p166 = scmp.eq.s32.totalorder %s24, 5
      %p167 = por %p165, %p166
      %p169 = scmp.ne.s32.totalorder %s152, %s168
      %p170 = scmp.eq.s32.totalorder %s24, 0
      %p171 = por %p169, %p170
      %p172 = scmp.le.s32.totalorder 1, %s18
      %p173 = scmp.lt.s32.totalorder %s18, 7
      %p174 = pnand %p172, %p173
      %p175 = pneg %p174
      // Predicated region
      $region9: #{tpu_custom_call.1} parent=5 // pred_check
        _
      $region10: #{tpu_custom_call.1} parent=5 // pred_check_branch
        %177 = sbr.rel (%p174) target = $region12
      $region11: #{tpu_custom_call.1} parent=5 // pred_region
        %s178 = ssub.s32 %s18, 1
        // Predicated region
        $region13: #{tpu_custom_call.1} parent=11 // pred_check
          %p179 = pneg %p84
        $region14: #{tpu_custom_call.1} parent=11 // pred_check_branch
          %181 = sbr.rel (%p179) target = $region16
        $region15: #{tpu_custom_call.1} parent=11 // pred_region
          %s182 = smul.u32 8, %s27
          %s184 = ssub.s32 2560, 2560
          %185 = vsyncadd [#allocation8], %s184
          %s186 = smul.addr %s182, 5
          %s187 = smul.addr %s186, 64
          %s188 = scalar_lea.hbm %s1, %s187
          %s189 = sshll.u32 [#allocation7], 4
          %s190 = int_to_ptr.vmem [resolvable:$true] %s189
          %195 = dma.hbm_to_vmem [thread:$0]  %s188, 2560, %s190, [#allocation8], 64, 64, 4
        $region16: #{tpu_custom_call.1} parent=11 // pred_fallthru
          _
        // Predicated region
        $region17: #{tpu_custom_call.1} parent=11 // pred_check
          %p196 = pneg %p110
        $region18: #{tpu_custom_call.1} parent=11 // pred_check_branch
          %198 = sbr.rel (%p196) target = $region20
        $region19: #{tpu_custom_call.1} parent=11 // pred_region
          %s199 = smul.u32 8, %s27
          %s201 = ssub.s32 256, 256
          %202 = vsyncadd [#allocation8], %s201
          %s203 = smul.addr %s199, 32
          %s204 = scalar_lea.hbm %s2, %s203
          %s205 = sshll.u32 [#allocation9], 4
          %s206 = int_to_ptr.vmem [resolvable:$true] %s205
          %211 = dma.hbm_to_vmem [thread:$0]  %s204, 256, %s206, [#allocation8], 32, 32, 2
        $region20: #{tpu_custom_call.1} parent=11 // pred_fallthru
          _
        // Predicated region
        $region21: #{tpu_custom_call.1} parent=11 // pred_check
          %p212 = pneg %p136
        $region22: #{tpu_custom_call.1} parent=11 // pred_check_branch
          %214 = sbr.rel (%p212) target = $region24
        $region23: #{tpu_custom_call.1} parent=11 // pred_region
          %s216 = ssub.s32 256, 256
          %217 = vsyncadd [#allocation11], %s216
          %s218 = smul.addr %s27, 2
          %s219 = smul.addr %s218, 128
          %s220 = scalar_lea.hbm %s3, %s219
          %s222 = sshll.u32 [#allocation10], 4
          %s223 = int_to_ptr.vmem [resolvable:$true] %s222
          %225 = dma.hbm_to_vmem [thread:$0]  %s220, 256, %s223, [#allocation11]
        $region24: #{tpu_custom_call.1} parent=11 // pred_fallthru
          _
      $region12: #{tpu_custom_call.1} parent=5 // pred_fallthru
        _
      %p226 = scmp.lt.s32.totalorder %s18, 6
      // Predicated region
      $region25: #{tpu_custom_call.1} parent=5 // pred_check
        %p227 = pneg %p226
      $region26: #{tpu_custom_call.1} parent=5 // pred_check_branch
        %229 = sbr.rel (%p227) target = $region28
      $region27: #{tpu_custom_call.1} parent=5 // pred_region
        // Predicated region
        $region29: #{tpu_custom_call.1} parent=27 // pred_check
          %p230 = pneg %p52
        $region30: #{tpu_custom_call.1} parent=27 // pred_check_branch
          %232 = sbr.rel (%p230) target = $region32
        $region31: #{tpu_custom_call.1} parent=27 // pred_region
          %s233 = sand.u32 %s42, 1
          %s234 = scalar_lea.sflag [#allocation5], %s233
          %s235 = sand.u32 %s42, 1
          %s236 = smul.addr %s235, 8
          %s237 = scalar_lea.vmem [#allocation4], %s236
          %s239 = ssub.s32 128, 128
          %240 = vsyncadd %s234, %s239
          %s241 = sadd.s32 %s25, %s26
          %s242 = smul.addr %s241, 128
          %s243 = scalar_lea.hbm %s0, %s242
          %s245 = sshll.u32 %s237, 4
          %s246 = int_to_ptr.vmem [resolvable:$true] %s245
          %248 = dma.hbm_to_vmem [thread:$0]  %s243, 128, %s246, %s234
        $region32: #{tpu_custom_call.1} parent=27 // pred_fallthru
          _
      $region28: #{tpu_custom_call.1} parent=5 // pred_fallthru
        _
      %p249 = scmp.le.s32.totalorder 1, %s18
      %p250 = scmp.lt.s32.totalorder %s18, 7
      %p251 = pnand %p249, %p250
      %p252 = pneg %p251
      // Predicated region
      $region33: #{tpu_custom_call.1} parent=5 // pred_check
        _
      $region34: #{tpu_custom_call.1} parent=5 // pred_check_branch
        %254 = sbr.rel (%p251) target = $region36
      $region35: #{tpu_custom_call.1} parent=5 // pred_region
        %s255 = ssub.s32 %s18, 1
        %s256 = sand.u32 %s45, 1
        %s257 = scalar_lea.sflag [#allocation5], %s256
        %s258 = sand.u32 %s45, 1
        %s259 = smul.addr %s258, 8
        %s260 = scalar_lea.vmem [#allocation4], %s259
        // Predicated region
        $region37: #{tpu_custom_call.1} parent=35 // pred_check
          %p261 = pneg %p58
        $region38: #{tpu_custom_call.1} parent=35 // pred_check_branch
          %263 = sbr.rel (%p261) target = $region40
        $region39: #{tpu_custom_call.1} parent=35 // pred_region
          %264 = dma.done %s257, 128
        $region40: #{tpu_custom_call.1} parent=35 // pred_fallthru
          _
        // Predicated region
        $region41: #{tpu_custom_call.1} parent=35 // pred_check
          %p265 = pneg %p84
        $region42: #{tpu_custom_call.1} parent=35 // pred_check_branch
          %267 = sbr.rel (%p265) target = $region44
        $region43: #{tpu_custom_call.1} parent=35 // pred_region
          %268 = dma.done [#allocation8], 2560
        $region44: #{tpu_custom_call.1} parent=35 // pred_fallthru
          _
        // Predicated region
        $region45: #{tpu_custom_call.1} parent=35 // pred_check
          %p269 = pneg %p110
        $region46: #{tpu_custom_call.1} parent=35 // pred_check_branch
          %271 = sbr.rel (%p269) target = $region48
        $region47: #{tpu_custom_call.1} parent=35 // pred_region
          %272 = dma.done [#allocation8], 256
        $region48: #{tpu_custom_call.1} parent=35 // pred_fallthru
          _
        // Predicated region
        $region49: #{tpu_custom_call.1} parent=35 // pred_check
          %p273 = pneg %p136
        $region50: #{tpu_custom_call.1} parent=35 // pred_check_branch
          %275 = sbr.rel (%p273) target = $region52
        $region51: #{tpu_custom_call.1} parent=35 // pred_region
          %276 = dma.done [#allocation11], 256
        $region52: #{tpu_custom_call.1} parent=35 // pred_fallthru
          _
        %s277 = sand.u32 %s45, 1
        %s278 = scalar_lea.sflag [#allocation5], %s277
        %s279 = sand.u32 %s45, 1
        %s280 = smul.addr %s279, 8
        %s281 = scalar_lea.vmem [#allocation4], %s280
        %p282 = pneg %p58
        %p283 = pneg %p55
        %p284 = pneg %p84
        %p285 = pneg %p81
        %p286 = pneg %p110
        %p287 = pneg %p107
        %p288 = pneg %p136
        %p289 = pneg %p133
        %p290 = pneg %p164
        %p291 = pneg %p161
        %s292 = sand.u32 %s151, 1
        %s293 = scalar_lea.sflag [#allocation6], %s292
        %s294 = sand.u32 %s151, 1
        %s295 = smul.addr %s294, 8
        %s296 = scalar_lea.vmem [#allocation12], %s295
        %s297 = smul.u32 8, %s27
        %s298 = smul.u32 8, %s27
        %v299 = vld [vmem:[%s260] sm:$0xff]
        %v300 = vld [vmem:[#allocation10] sm:$0xff]
        %v301 = vld [vmem:[#allocation10 + $0x8] sm:$0xff]
        %p302 = scmp.eq.s32.totalorder %s28, 0
        // Predicated region
        $region53: #{tpu_custom_call.1} parent=35 // pred_check
          %p303 = pneg %p302
        $region54: #{tpu_custom_call.1} parent=35 // pred_check_branch
          %305 = sbr.rel (%p303) target = $region56
        $region55: #{tpu_custom_call.1} parent=35 // pred_region
          %vm306 = vcmask 261120
          %307 = vst.msk [vmem:[#allocation2] sm:$0xff] %vm306, %v301
          %309 = vrot.lane.b32.xlu0 %v301, 96
          %v310 = vpop.permute.xlu0 %309
          %312 = vst.msk [vmem:[#allocation3] sm:$0xff] %vm306, %v310
        $region56: #{tpu_custom_call.1} parent=35 // pred_fallthru
          _
        %v313 = vld [vmem:[#allocation2] sm:$0xff]
        %315 = vrot.lane.b32.xlu0 %v313, 8
        %v316 = vpop.permute.xlu0 %315
        %vm318 = vcmask 64512
        %v319 = vsel %vm318, %v299, %v316
        %v320 = vld [vmem:[#allocation7] sm:$0xf]
        %v321 = vld [vmem:[#allocation7 + $0x14] sm:$0xf]
        %v322 = vld [vmem:[#allocation7 + $0x28] sm:$0xf]
        %v323 = vld [vmem:[#allocation7 + $0x3c] sm:$0xf]
        %v324 = vld [vmem:[#allocation7 + $0x50] sm:$0xf]
        %v325 = vld [vmem:[#allocation7 + $0x64] sm:$0xf]
        %v326 = vld [vmem:[#allocation7 + $0x78] sm:$0xf]
        %v327 = vld [vmem:[#allocation7 + $0x8c] sm:$0xf]
        %v328 = vunpack.c.l.bf16 %v320
        %v329 = vunpack.c.l.bf16 %v321
        %v330 = vunpack.c.l.bf16 %v322
        %v331 = vunpack.c.l.bf16 %v323
        %v332 = vunpack.c.l.bf16 %v324
        %v333 = vunpack.c.l.bf16 %v325
        %v334 = vunpack.c.l.bf16 %v326
        %v335 = vunpack.c.l.bf16 %v327
        %v336 = vlaneseq
        %v337 = vshrl.u32 %v336, 7
        %v338 = vsub.s32 0, %v337
        %v339 = vrot.slane %v319, %v338
        %341 = vbcast.lane.b32.xlu0 %v339, 256
        %v342 = vpop.permute.xlu0 %341
        %v343 = vlaneseq
        %v344 = vshrl.u32 %v343, 7
        %v345 = vsub.s32 1, %v344
        %v346 = vrot.slane %v319, %v345
        %348 = vbcast.lane.b32.xlu0 %v346, 256
        %v349 = vpop.permute.xlu0 %348
        %v350 = vlaneseq
        %v351 = vshrl.u32 %v350, 7
        %v352 = vsub.s32 2, %v351
        %v353 = vrot.slane %v319, %v352
        %355 = vbcast.lane.b32.xlu0 %v353, 256
        %v356 = vpop.permute.xlu0 %355
        %v357 = vlaneseq
        %v358 = vshrl.u32 %v357, 7
        %v359 = vsub.s32 3, %v358
        %v360 = vrot.slane %v319, %v359
        %362 = vbcast.lane.b32.xlu0 %v360, 256
        %v363 = vpop.permute.xlu0 %362
        %v364 = vlaneseq
        %v365 = vshrl.u32 %v364, 7
        %v366 = vsub.s32 4, %v365
        %v367 = vrot.slane %v319, %v366
        %369 = vbcast.lane.b32.xlu0 %v367, 256
        %v370 = vpop.permute.xlu0 %369
        %v371 = vlaneseq
        %v372 = vshrl.u32 %v371, 7
        %v373 = vsub.s32 5, %v372
        %v374 = vrot.slane %v319, %v373
        %376 = vbcast.lane.b32.xlu0 %v374, 256
        %v377 = vpop.permute.xlu0 %376
        %v378 = vlaneseq
        %v379 = vshrl.u32 %v378, 7
        %v380 = vsub.s32 6, %v379
        %v381 = vrot.slane %v319, %v380
        %383 = vbcast.lane.b32.xlu0 %v381, 256
        %v384 = vpop.permute.xlu0 %383
        %v385 = vlaneseq
        %v386 = vshrl.u32 %v385, 7
        %v387 = vsub.s32 7, %v386
        %v388 = vrot.slane %v319, %v387
        %390 = vbcast.lane.b32.xlu0 %v388, 256
        %v391 = vpop.permute.xlu0 %390
        %v392 = vmul.f32 %v342, %v328
        %v393 = vmul.f32 %v349, %v329
        %v394 = vmul.f32 %v356, %v330
        %v395 = vmul.f32 %v363, %v331
        %v396 = vmul.f32 %v370, %v332
        %v397 = vmul.f32 %v377, %v333
        %v398 = vmul.f32 %v384, %v334
        %v399 = vmul.f32 %v391, %v335
        %v400 = vrot.slane %v392, 4
        %v401 = vadd.f32 %v392, %v400
        %v402 = vrot.slane %v401, 2
        %v403 = vadd.f32 %v401, %v402
        %v404 = vrot.slane %v403, 1
        %v405 = vadd.f32 %v403, %v404
        %v406 = vrot.slane %v393, 4
        %v407 = vadd.f32 %v393, %v406
        %v408 = vrot.slane %v407, 2
        %v409 = vadd.f32 %v407, %v408
        %v410 = vrot.slane %v409, 1
        %v411 = vadd.f32 %v409, %v410
        %v412 = vrot.slane %v394, 4
        %v413 = vadd.f32 %v394, %v412
        %v414 = vrot.slane %v413, 2
        %v415 = vadd.f32 %v413, %v414
        %v416 = vrot.slane %v415, 1
        %v417 = vadd.f32 %v415, %v416
        %v418 = vrot.slane %v395, 4
        %v419 = vadd.f32 %v395, %v418
        %v420 = vrot.slane %v419, 2
        %v421 = vadd.f32 %v419, %v420
        %v422 = vrot.slane %v421, 1
        %v423 = vadd.f32 %v421, %v422
        %v424 = vrot.slane %v396, 4
        %v425 = vadd.f32 %v396, %v424
        %v426 = vrot.slane %v425, 2
        %v427 = vadd.f32 %v425, %v426
        %v428 = vrot.slane %v427, 1
        %v429 = vadd.f32 %v427, %v428
        %v430 = vrot.slane %v397, 4
        %v431 = vadd.f32 %v397, %v430
        %v432 = vrot.slane %v431, 2
        %v433 = vadd.f32 %v431, %v432
        %v434 = vrot.slane %v433, 1
        %v435 = vadd.f32 %v433, %v434
        %v436 = vrot.slane %v398, 4
        %v437 = vadd.f32 %v398, %v436
        %v438 = vrot.slane %v437, 2
        %v439 = vadd.f32 %v437, %v438
        %v440 = vrot.slane %v439, 1
        %v441 = vadd.f32 %v439, %v440
        %v442 = vrot.slane %v399, 4
        %v443 = vadd.f32 %v399, %v442
        %v444 = vrot.slane %v443, 2
        %v445 = vadd.f32 %v443, %v444
        %v446 = vrot.slane %v445, 1
        %v447 = vadd.f32 %v445, %v446
        %vm456 = vcmask 1041409
        %v457 = vsel %vm456, %v411, %v405
        %vm458 = vcmask 1042434
        %v459 = vsel %vm458, %v417, %v457
        %vm460 = vcmask 1043459
        %v461 = vsel %vm460, %v423, %v459
        %vm462 = vcmask 1044484
        %v463 = vsel %vm462, %v429, %v461
        %vm464 = vcmask 1045509
        %v465 = vsel %vm464, %v435, %v463
        %vm466 = vcmask 1046534
        %v467 = vsel %vm466, %v441, %v465
        %vm468 = vcmask 1047559
        %v469 = vsel %vm468, %v447, %v467
        %v471 = vadd.f32 %v300, %v469
        %v472 = vld [vmem:[#allocation7 + $0x4] sm:$0xf]
        %v473 = vld [vmem:[#allocation7 + $0x18] sm:$0xf]
        %v474 = vld [vmem:[#allocation7 + $0x2c] sm:$0xf]
        %v475 = vld [vmem:[#allocation7 + $0x40] sm:$0xf]
        %v476 = vld [vmem:[#allocation7 + $0x54] sm:$0xf]
        %v477 = vld [vmem:[#allocation7 + $0x68] sm:$0xf]
        %v478 = vld [vmem:[#allocation7 + $0x7c] sm:$0xf]
        %v479 = vld [vmem:[#allocation7 + $0x90] sm:$0xf]
        %v480 = vunpack.c.l.bf16 %v472
        %v481 = vunpack.c.l.bf16 %v473
        %v482 = vunpack.c.l.bf16 %v474
        %v483 = vunpack.c.l.bf16 %v475
        %v484 = vunpack.c.l.bf16 %v476
        %v485 = vunpack.c.l.bf16 %v477
        %v486 = vunpack.c.l.bf16 %v478
        %v487 = vunpack.c.l.bf16 %v479
        %s489 = sor.u32 256, 8
        %490 = vbcast.lane.b32.xlu0 %v339, %s489
        %v491 = vpop.permute.xlu0 %490
        %s493 = sor.u32 256, 8
        %494 = vbcast.lane.b32.xlu0 %v346, %s493
        %v495 = vpop.permute.xlu0 %494
        %s497 = sor.u32 256, 8
        %498 = vbcast.lane.b32.xlu0 %v353, %s497
        %v499 = vpop.permute.xlu0 %498
        %s501 = sor.u32 256, 8
        %502 = vbcast.lane.b32.xlu0 %v360, %s501
        %v503 = vpop.permute.xlu0 %502
        %s505 = sor.u32 256, 8
        %506 = vbcast.lane.b32.xlu0 %v367, %s505
        %v507 = vpop.permute.xlu0 %506
        %s509 = sor.u32 256, 8
        %510 = vbcast.lane.b32.xlu0 %v374, %s509
        %v511 = vpop.permute.xlu0 %510
        %s513 = sor.u32 256, 8
        %514 = vbcast.lane.b32.xlu0 %v381, %s513
        %v515 = vpop.permute.xlu0 %514
        %s517 = sor.u32 256, 8
        %518 = vbcast.lane.b32.xlu0 %v388, %s517
        %v519 = vpop.permute.xlu0 %518
        %v520 = vmul.f32 %v491, %v480
        %v521 = vmul.f32 %v495, %v481
        %v522 = vmul.f32 %v499, %v482
        %v523 = vmul.f32 %v503, %v483
        %v524 = vmul.f32 %v507, %v484
        %v525 = vmul.f32 %v511, %v485
        %v526 = vmul.f32 %v515, %v486
        %v527 = vmul.f32 %v519, %v487
        %v528 = vrot.slane %v520, 4
        %v529 = vadd.f32 %v520, %v528
        %v530 = vrot.slane %v529, 2
        %v531 = vadd.f32 %v529, %v530
        %v532 = vrot.slane %v531, 1
        %v533 = vadd.f32 %v531, %v532
        %v534 = vrot.slane %v521, 4
        %v535 = vadd.f32 %v521, %v534
        %v536 = vrot.slane %v535, 2
        %v537 = vadd.f32 %v535, %v536
        %v538 = vrot.slane %v537, 1
        %v539 = vadd.f32 %v537, %v538
        %v540 = vrot.slane %v522, 4
        %v541 = vadd.f32 %v522, %v540
        %v542 = vrot.slane %v541, 2
        %v543 = vadd.f32 %v541, %v542
        %v544 = vrot.slane %v543, 1
        %v545 = vadd.f32 %v543, %v544
        %v546 = vrot.slane %v523, 4
        %v547 = vadd.f32 %v523, %v546
        %v548 = vrot.slane %v547, 2
        %v549 = vadd.f32 %v547, %v548
        %v550 = vrot.slane %v549, 1
        %v551 = vadd.f32 %v549, %v550
        %v552 = vrot.slane %v524, 4
        %v553 = vadd.f32 %v524, %v552
        %v554 = vrot.slane %v553, 2
        %v555 = vadd.f32 %v553, %v554
        %v556 = vrot.slane %v555, 1
        %v557 = vadd.f32 %v555, %v556
        %v558 = vrot.slane %v525, 4
        %v559 = vadd.f32 %v525, %v558
        %v560 = vrot.slane %v559, 2
        %v561 = vadd.f32 %v559, %v560
        %v562 = vrot.slane %v561, 1
        %v563 = vadd.f32 %v561, %v562
        %v564 = vrot.slane %v526, 4
        %v565 = vadd.f32 %v526, %v564
        %v566 = vrot.slane %v565, 2
        %v567 = vadd.f32 %v565, %v566
        %v568 = vrot.slane %v567, 1
        %v569 = vadd.f32 %v567, %v568
        %v570 = vrot.slane %v527, 4
        %v571 = vadd.f32 %v527, %v570
        %v572 = vrot.slane %v571, 2
        %v573 = vadd.f32 %v571, %v572
        %v574 = vrot.slane %v573, 1
        %v575 = vadd.f32 %v573, %v574
        %v584 = vsel %vm456, %v539, %v533
        %v585 = vsel %vm458, %v545, %v584
        %v586 = vsel %vm460, %v551, %v585
        %v587 = vsel %vm462, %v557, %v586
        %v588 = vsel %vm464, %v563, %v587
        %v589 = vsel %vm466, %v569, %v588
        %v590 = vsel %vm468, %v575, %v589
        %v592 = vadd.f32 %v471, %v590
        %v593 = vld [vmem:[#allocation7 + $0x8] sm:$0xf]
        %v594 = vld [vmem:[#allocation7 + $0x1c] sm:$0xf]
        %v595 = vld [vmem:[#allocation7 + $0x30] sm:$0xf]
        %v596 = vld [vmem:[#allocation7 + $0x44] sm:$0xf]
        %v597 = vld [vmem:[#allocation7 + $0x58] sm:$0xf]
        %v598 = vld [vmem:[#allocation7 + $0x6c] sm:$0xf]
        %v599 = vld [vmem:[#allocation7 + $0x80] sm:$0xf]
        %v600 = vld [vmem:[#allocation7 + $0x94] sm:$0xf]
        %v601 = vunpack.c.l.bf16 %v593
        %v602 = vunpack.c.l.bf16 %v594
        %v603 = vunpack.c.l.bf16 %v595
        %v604 = vunpack.c.l.bf16 %v596
        %v605 = vunpack.c.l.bf16 %v597
        %v606 = vunpack.c.l.bf16 %v598
        %v607 = vunpack.c.l.bf16 %v599
        %v608 = vunpack.c.l.bf16 %v600
        %s610 = sor.u32 256, 16
        %611 = vbcast.lane.b32.xlu0 %v339, %s610
        %v612 = vpop.permute.xlu0 %611
        %s614 = sor.u32 256, 16
        %615 = vbcast.lane.b32.xlu0 %v346, %s614
        %v616 = vpop.permute.xlu0 %615
        %s618 = sor.u32 256, 16
        %619 = vbcast.lane.b32.xlu0 %v353, %s618
        %v620 = vpop.permute.xlu0 %619
        %s622 = sor.u32 256, 16
        %623 = vbcast.lane.b32.xlu0 %v360, %s622
        %v624 = vpop.permute.xlu0 %623
        %s626 = sor.u32 256, 16
        %627 = vbcast.lane.b32.xlu0 %v367, %s626
        %v628 = vpop.permute.xlu0 %627
        %s630 = sor.u32 256, 16
        %631 = vbcast.lane.b32.xlu0 %v374, %s630
        %v632 = vpop.permute.xlu0 %631
        %s634 = sor.u32 256, 16
        %635 = vbcast.lane.b32.xlu0 %v381, %s634
        %v636 = vpop.permute.xlu0 %635
        %s638 = sor.u32 256, 16
        %639 = vbcast.lane.b32.xlu0 %v388, %s638
        %v640 = vpop.permute.xlu0 %639
        %v641 = vmul.f32 %v612, %v601
        %v642 = vmul.f32 %v616, %v602
        %v643 = vmul.f32 %v620, %v603
        %v644 = vmul.f32 %v624, %v604
        %v645 = vmul.f32 %v628, %v605
        %v646 = vmul.f32 %v632, %v606
        %v647 = vmul.f32 %v636, %v607
        %v648 = vmul.f32 %v640, %v608
        %v649 = vrot.slane %v641, 4
        %v650 = vadd.f32 %v641, %v649
        %v651 = vrot.slane %v650, 2
        %v652 = vadd.f32 %v650, %v651
        %v653 = vrot.slane %v652, 1
        %v654 = vadd.f32 %v652, %v653
        %v655 = vrot.slane %v642, 4
        %v656 = vadd.f32 %v642, %v655
        %v657 = vrot.slane %v656, 2
        %v658 = vadd.f32 %v656, %v657
        %v659 = vrot.slane %v658, 1
        %v660 = vadd.f32 %v658, %v659
        %v661 = vrot.slane %v643, 4
        %v662 = vadd.f32 %v643, %v661
        %v663 = vrot.slane %v662, 2
        %v664 = vadd.f32 %v662, %v663
        %v665 = vrot.slane %v664, 1
        %v666 = vadd.f32 %v664, %v665
        %v667 = vrot.slane %v644, 4
        %v668 = vadd.f32 %v644, %v667
        %v669 = vrot.slane %v668, 2
        %v670 = vadd.f32 %v668, %v669
        %v671 = vrot.slane %v670, 1
        %v672 = vadd.f32 %v670, %v671
        %v673 = vrot.slane %v645, 4
        %v674 = vadd.f32 %v645, %v673
        %v675 = vrot.slane %v674, 2
        %v676 = vadd.f32 %v674, %v675
        %v677 = vrot.slane %v676, 1
        %v678 = vadd.f32 %v676, %v677
        %v679 = vrot.slane %v646, 4
        %v680 = vadd.f32 %v646, %v679
        %v681 = vrot.slane %v680, 2
        %v682 = vadd.f32 %v680, %v681
        %v683 = vrot.slane %v682, 1
        %v684 = vadd.f32 %v682, %v683
        %v685 = vrot.slane %v647, 4
        %v686 = vadd.f32 %v647, %v685
        %v687 = vrot.slane %v686, 2
        %v688 = vadd.f32 %v686, %v687
        %v689 = vrot.slane %v688, 1
        %v690 = vadd.f32 %v688, %v689
        %v691 = vrot.slane %v648, 4
        %v692 = vadd.f32 %v648, %v691
        %v693 = vrot.slane %v692, 2
        %v694 = vadd.f32 %v692, %v693
        %v695 = vrot.slane %v694, 1
        %v696 = vadd.f32 %v694, %v695
        %v705 = vsel %vm456, %v660, %v654
        %v706 = vsel %vm458, %v666, %v705
        %v707 = vsel %vm460, %v672, %v706
        %v708 = vsel %vm462, %v678, %v707
        %v709 = vsel %vm464, %v684, %v708
        %v710 = vsel %vm466, %v690, %v709
        %v711 = vsel %vm468, %v696, %v710
        %v713 = vadd.f32 %v592, %v711
        %v714 = vld [vmem:[#allocation7 + $0xc] sm:$0xf]
        %v715 = vld [vmem:[#allocation7 + $0x20] sm:$0xf]
        %v716 = vld [vmem:[#allocation7 + $0x34] sm:$0xf]
        %v717 = vld [vmem:[#allocation7 + $0x48] sm:$0xf]
        %v718 = vld [vmem:[#allocation7 + $0x5c] sm:$0xf]
        %v719 = vld [vmem:[#allocation7 + $0x70] sm:$0xf]
        %v720 = vld [vmem:[#allocation7 + $0x84] sm:$0xf]
        %v721 = vld [vmem:[#allocation7 + $0x98] sm:$0xf]
        %v722 = vunpack.c.l.bf16 %v714
        %v723 = vunpack.c.l.bf16 %v715
        %v724 = vunpack.c.l.bf16 %v716
        %v725 = vunpack.c.l.bf16 %v717
        %v726 = vunpack.c.l.bf16 %v718
        %v727 = vunpack.c.l.bf16 %v719
        %v728 = vunpack.c.l.bf16 %v720
        %v729 = vunpack.c.l.bf16 %v721
        %s731 = sor.u32 256, 24
        %732 = vbcast.lane.b32.xlu0 %v339, %s731
        %v733 = vpop.permute.xlu0 %732
        %s735 = sor.u32 256, 24
        %736 = vbcast.lane.b32.xlu0 %v346, %s735
        %v737 = vpop.permute.xlu0 %736
        %s739 = sor.u32 256, 24
        %740 = vbcast.lane.b32.xlu0 %v353, %s739
        %v741 = vpop.permute.xlu0 %740
        %s743 = sor.u32 256, 24
        %744 = vbcast.lane.b32.xlu0 %v360, %s743
        %v745 = vpop.permute.xlu0 %744
        %s747 = sor.u32 256, 24
        %748 = vbcast.lane.b32.xlu0 %v367, %s747
        %v749 = vpop.permute.xlu0 %748
        %s751 = sor.u32 256, 24
        %752 = vbcast.lane.b32.xlu0 %v374, %s751
        %v753 = vpop.permute.xlu0 %752
        %s755 = sor.u32 256, 24
        %756 = vbcast.lane.b32.xlu0 %v381, %s755
        %v757 = vpop.permute.xlu0 %756
        %s759 = sor.u32 256, 24
        %760 = vbcast.lane.b32.xlu0 %v388, %s759
        %v761 = vpop.permute.xlu0 %760
        %v762 = vmul.f32 %v733, %v722
        %v763 = vmul.f32 %v737, %v723
        %v764 = vmul.f32 %v741, %v724
        %v765 = vmul.f32 %v745, %v725
        %v766 = vmul.f32 %v749, %v726
        %v767 = vmul.f32 %v753, %v727
        %v768 = vmul.f32 %v757, %v728
        %v769 = vmul.f32 %v761, %v729
        %v770 = vrot.slane %v762, 4
        %v771 = vadd.f32 %v762, %v770
        %v772 = vrot.slane %v771, 2
        %v773 = vadd.f32 %v771, %v772
        %v774 = vrot.slane %v773, 1
        %v775 = vadd.f32 %v773, %v774
        %v776 = vrot.slane %v763, 4
        %v777 = vadd.f32 %v763, %v776
        %v778 = vrot.slane %v777, 2
        %v779 = vadd.f32 %v777, %v778
        %v780 = vrot.slane %v779, 1
        %v781 = vadd.f32 %v779, %v780
        %v782 = vrot.slane %v764, 4
        %v783 = vadd.f32 %v764, %v782
        %v784 = vrot.slane %v783, 2
        %v785 = vadd.f32 %v783, %v784
        %v786 = vrot.slane %v785, 1
        %v787 = vadd.f32 %v785, %v786
        %v788 = vrot.slane %v765, 4
        %v789 = vadd.f32 %v765, %v788
        %v790 = vrot.slane %v789, 2
        %v791 = vadd.f32 %v789, %v790
        %v792 = vrot.slane %v791, 1
        %v793 = vadd.f32 %v791, %v792
        %v794 = vrot.slane %v766, 4
        %v795 = vadd.f32 %v766, %v794
        %v796 = vrot.slane %v795, 2
        %v797 = vadd.f32 %v795, %v796
        %v798 = vrot.slane %v797, 1
        %v799 = vadd.f32 %v797, %v798
        %v800 = vrot.slane %v767, 4
        %v801 = vadd.f32 %v767, %v800
        %v802 = vrot.slane %v801, 2
        %v803 = vadd.f32 %v801, %v802
        %v804 = vrot.slane %v803, 1
        %v805 = vadd.f32 %v803, %v804
        %v806 = vrot.slane %v768, 4
        %v807 = vadd.f32 %v768, %v806
        %v808 = vrot.slane %v807, 2
        %v809 = vadd.f32 %v807, %v808
        %v810 = vrot.slane %v809, 1
        %v811 = vadd.f32 %v809, %v810
        %v812 = vrot.slane %v769, 4
        %v813 = vadd.f32 %v769, %v812
        %v814 = vrot.slane %v813, 2
        %v815 = vadd.f32 %v813, %v814
        %v816 = vrot.slane %v815, 1
        %v817 = vadd.f32 %v815, %v816
        %v826 = vsel %vm456, %v781, %v775
        %v827 = vsel %vm458, %v787, %v826
        %v828 = vsel %vm460, %v793, %v827
        %v829 = vsel %vm462, %v799, %v828
        %v830 = vsel %vm464, %v805, %v829
        %v831 = vsel %vm466, %v811, %v830
        %v832 = vsel %vm468, %v817, %v831
        %v834 = vadd.f32 %v713, %v832
        %v835 = vld [vmem:[#allocation7 + $0x10] sm:$0xf]
        %v836 = vld [vmem:[#allocation7 + $0x24] sm:$0xf]
        %v837 = vld [vmem:[#allocation7 + $0x38] sm:$0xf]
        %v838 = vld [vmem:[#allocation7 + $0x4c] sm:$0xf]
        %v839 = vld [vmem:[#allocation7 + $0x60] sm:$0xf]
        %v840 = vld [vmem:[#allocation7 + $0x74] sm:$0xf]
        %v841 = vld [vmem:[#allocation7 + $0x88] sm:$0xf]
        %v842 = vld [vmem:[#allocation7 + $0x9c] sm:$0xf]
        %v843 = vunpack.c.l.bf16 %v835
        %v844 = vunpack.c.l.bf16 %v836
        %v845 = vunpack.c.l.bf16 %v837
        %v846 = vunpack.c.l.bf16 %v838
        %v847 = vunpack.c.l.bf16 %v839
        %v848 = vunpack.c.l.bf16 %v840
        %v849 = vunpack.c.l.bf16 %v841
        %v850 = vunpack.c.l.bf16 %v842
        %s852 = sor.u32 256, 32
        %853 = vbcast.lane.b32.xlu0 %v339, %s852
        %v854 = vpop.permute.xlu0 %853
        %s856 = sor.u32 256, 32
        %857 = vbcast.lane.b32.xlu0 %v346, %s856
        %v858 = vpop.permute.xlu0 %857
        %s860 = sor.u32 256, 32
        %861 = vbcast.lane.b32.xlu0 %v353, %s860
        %v862 = vpop.permute.xlu0 %861
        %s864 = sor.u32 256, 32
        %865 = vbcast.lane.b32.xlu0 %v360, %s864
        %v866 = vpop.permute.xlu0 %865
        %s868 = sor.u32 256, 32
        %869 = vbcast.lane.b32.xlu0 %v367, %s868
        %v870 = vpop.permute.xlu0 %869
        %s872 = sor.u32 256, 32
        %873 = vbcast.lane.b32.xlu0 %v374, %s872
        %v874 = vpop.permute.xlu0 %873
        %s876 = sor.u32 256, 32
        %877 = vbcast.lane.b32.xlu0 %v381, %s876
        %v878 = vpop.permute.xlu0 %877
        %s880 = sor.u32 256, 32
        %881 = vbcast.lane.b32.xlu0 %v388, %s880
        %v882 = vpop.permute.xlu0 %881
        %v883 = vmul.f32 %v854, %v843
        %v884 = vmul.f32 %v858, %v844
        %v885 = vmul.f32 %v862, %v845
        %v886 = vmul.f32 %v866, %v846
        %v887 = vmul.f32 %v870, %v847
        %v888 = vmul.f32 %v874, %v848
        %v889 = vmul.f32 %v878, %v849
        %v890 = vmul.f32 %v882, %v850
        %v891 = vrot.slane %v883, 4
        %v892 = vadd.f32 %v883, %v891
        %v893 = vrot.slane %v892, 2
        %v894 = vadd.f32 %v892, %v893
        %v895 = vrot.slane %v894, 1
        %v896 = vadd.f32 %v894, %v895
        %v897 = vrot.slane %v884, 4
        %v898 = vadd.f32 %v884, %v897
        %v899 = vrot.slane %v898, 2
        %v900 = vadd.f32 %v898, %v899
        %v901 = vrot.slane %v900, 1
        %v902 = vadd.f32 %v900, %v901
        %v903 = vrot.slane %v885, 4
        %v904 = vadd.f32 %v885, %v903
        %v905 = vrot.slane %v904, 2
        %v906 = vadd.f32 %v904, %v905
        %v907 = vrot.slane %v906, 1
        %v908 = vadd.f32 %v906, %v907
        %v909 = vrot.slane %v886, 4
        %v910 = vadd.f32 %v886, %v909
        %v911 = vrot.slane %v910, 2
        %v912 = vadd.f32 %v910, %v911
        %v913 = vrot.slane %v912, 1
        %v914 = vadd.f32 %v912, %v913
        %v915 = vrot.slane %v887, 4
        %v916 = vadd.f32 %v887, %v915
        %v917 = vrot.slane %v916, 2
        %v918 = vadd.f32 %v916, %v917
        %v919 = vrot.slane %v918, 1
        %v920 = vadd.f32 %v918, %v919
        %v921 = vrot.slane %v888, 4
        %v922 = vadd.f32 %v888, %v921
        %v923 = vrot.slane %v922, 2
        %v924 = vadd.f32 %v922, %v923
        %v925 = vrot.slane %v924, 1
        %v926 = vadd.f32 %v924, %v925
        %v927 = vrot.slane %v889, 4
        %v928 = vadd.f32 %v889, %v927
        %v929 = vrot.slane %v928, 2
        %v930 = vadd.f32 %v928, %v929
        %v931 = vrot.slane %v930, 1
        %v932 = vadd.f32 %v930, %v931
        %v933 = vrot.slane %v890, 4
        %v934 = vadd.f32 %v890, %v933
        %v935 = vrot.slane %v934, 2
        %v936 = vadd.f32 %v934, %v935
        %v937 = vrot.slane %v936, 1
        %v938 = vadd.f32 %v936, %v937
        %v947 = vsel %vm456, %v902, %v896
        %v948 = vsel %vm458, %v908, %v947
        %v949 = vsel %vm460, %v914, %v948
        %v950 = vsel %vm462, %v920, %v949
        %v951 = vsel %vm464, %v926, %v950
        %v952 = vsel %vm466, %v932, %v951
        %v953 = vsel %vm468, %v938, %v952
        %v955 = vadd.f32 %v834, %v953
        %v956 = vxor.u32 %v955, 2147483648
        %v957 = vmul.f32 %v956, 1.442695
        %v958 = vpow.pop %v957
        %v959 = vadd.f32 %v958, 1.0
        %v960 = vrcp.pop %v959
        %v961 = vmul.f32 1.0, %v960
        %v962 = vtanh.pop %v955
        %v963 = vld [vmem:[#allocation3] sm:$0xff]
        %965 = vrot.lane.b32.xlu0 %v963, 32
        %v966 = vpop.permute.xlu0 %965
        %v968 = vmul.f32 %v961, %v966
        %970 = vrot.lane.b32.xlu0 %v962, 64
        %v971 = vpop.permute.xlu0 %970
        %v973 = vmul.f32 %v961, %v971
        %975 = vrot.lane.b32.xlu0 %v973, 32
        %v976 = vpop.permute.xlu0 %975
        %v978 = vadd.f32 %v968, %v976
        %v979 = vtanh.pop %v978
        %981 = vrot.lane.b32.xlu0 %v979, 64
        %v982 = vpop.permute.xlu0 %981
        %v984 = vmul.f32 %v961, %v982
        %986 = vrot.lane.b32.xlu0 %v978, 96
        %v987 = vpop.permute.xlu0 %986
        %vm989 = vcmask 261120
        %990 = vst.msk [vmem:[#allocation3] sm:$0xff] %vm989, %v987
        %992 = vrot.lane.b32.xlu0 %v984, 32
        %v993 = vpop.permute.xlu0 %992
        %995 = vst.msk [vmem:[#allocation2] sm:$0xff] %vm989, %v993
        %v996 = vtanh.pop %v984
        %v997 = vld [vmem:[#allocation9] sm:$0x3]
        %v998 = vld [vmem:[#allocation9 + $0x2] sm:$0x3]
        %v999 = vld [vmem:[#allocation9 + $0x4] sm:$0x3]
        %v1000 = vld [vmem:[#allocation9 + $0x6] sm:$0x3]
        %v1001 = vld [vmem:[#allocation9 + $0x8] sm:$0x3]
        %v1002 = vld [vmem:[#allocation9 + $0xa] sm:$0x3]
        %v1003 = vld [vmem:[#allocation9 + $0xc] sm:$0x3]
        %v1004 = vld [vmem:[#allocation9 + $0xe] sm:$0x3]
        %v1005 = vunpack.c.l.bf16 %v997
        %v1006 = vunpack.c.l.bf16 %v998
        %v1007 = vunpack.c.l.bf16 %v999
        %v1008 = vunpack.c.l.bf16 %v1000
        %v1009 = vunpack.c.l.bf16 %v1001
        %v1010 = vunpack.c.l.bf16 %v1002
        %v1011 = vunpack.c.l.bf16 %v1003
        %v1012 = vunpack.c.l.bf16 %v1004
        %v1014 = vcombine.high %v996, %v996
        %v1016 = vunpack.c.l.s4 1966171168
        %v1017 = vunpack.c.0.s8 %v1016
        %v1018 = vlaneseq
        %v1019 = vshrl.u32 %v1018, 7
        %v1020 = vsub.s32 %v1017, %v1019
        %v1021 = vrot.slane %v996, %v1020
        %v1023 = vunpack.c.l.s4 1966171168
        %v1024 = vunpack.c.0.s8 %v1023
        %v1025 = vlaneseq
        %v1026 = vshrl.u32 %v1025, 7
        %v1027 = vsub.s32 %v1024, %v1026
        %v1028 = vrot.slane %v1014, %v1027
        %v1029 = vcombine.high %v1021, %v1021
        %v1030 = vcombine.high %v1028, %v1028
        %v1032 = vunpack.c.l.s4 1966171168
        %v1033 = vunpack.c.0.s8 %v1032
        %v1034 = vlaneseq
        %v1035 = vshrl.u32 %v1034, 7
        %v1036 = vsub.s32 %v1033, %v1035
        %v1037 = vrot.slane %v1021, %v1036
        %v1039 = vunpack.c.l.s4 1966171168
        %v1040 = vunpack.c.0.s8 %v1039
        %v1041 = vlaneseq
        %v1042 = vshrl.u32 %v1041, 7
        %v1043 = vsub.s32 %v1040, %v1042
        %v1044 = vrot.slane %v1028, %v1043
        %v1046 = vunpack.c.l.s4 1966171168
        %v1047 = vunpack.c.0.s8 %v1046
        %v1048 = vlaneseq
        %v1049 = vshrl.u32 %v1048, 7
        %v1050 = vsub.s32 %v1047, %v1049
        %v1051 = vrot.slane %v1029, %v1050
        %v1053 = vunpack.c.l.s4 1966171168
        %v1054 = vunpack.c.0.s8 %v1053
        %v1055 = vlaneseq
        %v1056 = vshrl.u32 %v1055, 7
        %v1057 = vsub.s32 %v1054, %v1056
        %v1058 = vrot.slane %v1030, %v1057
        %v1059 = vcombine.high %v1037, %v1037
        %v1060 = vcombine.high %v1044, %v1044
        %v1061 = vcombine.high %v1051, %v1051
        %v1062 = vcombine.high %v1058, %v1058
        %v1063 = vlaneseq
        %v1064 = vshrl.u32 %v1063, 7
        %v1065 = vsub.s32 0, %v1064
        %v1066 = vrot.slane %v1037, %v1065
        %v1067 = vlaneseq
        %v1068 = vshrl.u32 %v1067, 7
        %v1069 = vsub.s32 0, %v1068
        %v1070 = vrot.slane %v1051, %v1069
        %v1071 = vlaneseq
        %v1072 = vshrl.u32 %v1071, 7
        %v1073 = vsub.s32 0, %v1072
        %v1074 = vrot.slane %v1059, %v1073
        %v1075 = vlaneseq
        %v1076 = vshrl.u32 %v1075, 7
        %v1077 = vsub.s32 0, %v1076
        %v1078 = vrot.slane %v1061, %v1077
        %v1079 = vlaneseq
        %v1080 = vshrl.u32 %v1079, 7
        %v1081 = vsub.s32 0, %v1080
        %v1082 = vrot.slane %v1044, %v1081
        %v1083 = vlaneseq
        %v1084 = vshrl.u32 %v1083, 7
        %v1085 = vsub.s32 0, %v1084
        %v1086 = vrot.slane %v1058, %v1085
        %v1087 = vlaneseq
        %v1088 = vshrl.u32 %v1087, 7
        %v1089 = vsub.s32 0, %v1088
        %v1090 = vrot.slane %v1060, %v1089
        %v1091 = vlaneseq
        %v1092 = vshrl.u32 %v1091, 7
        %v1093 = vsub.s32 0, %v1092
        %v1094 = vrot.slane %v1062, %v1093
        %1095 = vrot.lane.b32.xlu0 %v1066, 32
        %v1096 = vpop.permute.xlu0 %1095
        %1097 = vrot.lane.b32.xlu0 %v1070, 32
        %v1098 = vpop.permute.xlu0 %1097
        %1099 = vrot.lane.b32.xlu0 %v1074, 32
        %v1100 = vpop.permute.xlu0 %1099
        %1101 = vrot.lane.b32.xlu0 %v1078, 32
        %v1102 = vpop.permute.xlu0 %1101
        %1103 = vrot.lane.b32.xlu0 %v1082, 32
        %v1104 = vpop.permute.xlu0 %1103
        %1105 = vrot.lane.b32.xlu0 %v1086, 32
        %v1106 = vpop.permute.xlu0 %1105
        %1107 = vrot.lane.b32.xlu0 %v1090, 32
        %v1108 = vpop.permute.xlu0 %1107
        %1109 = vrot.lane.b32.xlu0 %v1094, 32
        %v1110 = vpop.permute.xlu0 %1109
        %v1119 = vmul.f32 %v1005, %v1096
        %v1120 = vmul.f32 %v1006, %v1098
        %v1121 = vmul.f32 %v1007, %v1100
        %v1122 = vmul.f32 %v1008, %v1102
        %v1123 = vmul.f32 %v1009, %v1104
        %v1124 = vmul.f32 %v1010, %v1106
        %v1125 = vmul.f32 %v1011, %v1108
        %v1126 = vmul.f32 %v1012, %v1110
        %vm1127 = vcmask 257024
        %v1128 = vsel %vm1127, %v1119, 0.0
        %1129 = vadd.xlane.f32.xlu0 %v1128
        %v1130 = vpop.xlane.xlu0 %1129
        %v1131 = vsel %vm1127, %v1120, 0.0
        %1132 = vadd.xlane.f32.xlu0 %v1131
        %v1133 = vpop.xlane.xlu0 %1132
        %v1134 = vsel %vm1127, %v1121, 0.0
        %1135 = vadd.xlane.f32.xlu0 %v1134
        %v1136 = vpop.xlane.xlu0 %1135
        %v1137 = vsel %vm1127, %v1122, 0.0
        %1138 = vadd.xlane.f32.xlu0 %v1137
        %v1139 = vpop.xlane.xlu0 %1138
        %v1140 = vsel %vm1127, %v1123, 0.0
        %1141 = vadd.xlane.f32.xlu0 %v1140
        %v1142 = vpop.xlane.xlu0 %1141
        %v1143 = vsel %vm1127, %v1124, 0.0
        %1144 = vadd.xlane.f32.xlu0 %v1143
        %v1145 = vpop.xlane.xlu0 %1144
        %v1146 = vsel %vm1127, %v1125, 0.0
        %1147 = vadd.xlane.f32.xlu0 %v1146
        %v1148 = vpop.xlane.xlu0 %1147
        %v1149 = vsel %vm1127, %v1126, 0.0
        %1150 = vadd.xlane.f32.xlu0 %v1149
        %v1151 = vpop.xlane.xlu0 %1150
        %v1153 = vlaneseq
        %v1154 = vshrl.u32 %v1153, 7
        %v1155 = vsub.s32 0, %v1154
        %v1156 = vrot.slane %v301, %v1155
        %s1158 = sor.u32 256, 64
        %1159 = vbcast.lane.b32.xlu0 %v1156, %s1158
        %v1160 = vpop.permute.xlu0 %1159
        %v1161 = vlaneseq
        %v1162 = vshrl.u32 %v1161, 7
        %v1163 = vsub.s32 1, %v1162
        %v1164 = vrot.slane %v301, %v1163
        %s1166 = sor.u32 256, 64
        %1167 = vbcast.lane.b32.xlu0 %v1164, %s1166
        %v1168 = vpop.permute.xlu0 %1167
        %v1169 = vlaneseq
        %v1170 = vshrl.u32 %v1169, 7
        %v1171 = vsub.s32 2, %v1170
        %v1172 = vrot.slane %v301, %v1171
        %s1174 = sor.u32 256, 64
        %1175 = vbcast.lane.b32.xlu0 %v1172, %s1174
        %v1176 = vpop.permute.xlu0 %1175
        %v1177 = vlaneseq
        %v1178 = vshrl.u32 %v1177, 7
        %v1179 = vsub.s32 3, %v1178
        %v1180 = vrot.slane %v301, %v1179
        %s1182 = sor.u32 256, 64
        %1183 = vbcast.lane.b32.xlu0 %v1180, %s1182
        %v1184 = vpop.permute.xlu0 %1183
        %v1185 = vlaneseq
        %v1186 = vshrl.u32 %v1185, 7
        %v1187 = vsub.s32 4, %v1186
        %v1188 = vrot.slane %v301, %v1187
        %s1190 = sor.u32 256, 64
        %1191 = vbcast.lane.b32.xlu0 %v1188, %s1190
        %v1192 = vpop.permute.xlu0 %1191
        %v1193 = vlaneseq
        %v1194 = vshrl.u32 %v1193, 7
        %v1195 = vsub.s32 5, %v1194
        %v1196 = vrot.slane %v301, %v1195
        %s1198 = sor.u32 256, 64
        %1199 = vbcast.lane.b32.xlu0 %v1196, %s1198
        %v1200 = vpop.permute.xlu0 %1199
        %v1201 = vlaneseq
        %v1202 = vshrl.u32 %v1201, 7
        %v1203 = vsub.s32 6, %v1202
        %v1204 = vrot.slane %v301, %v1203
        %s1206 = sor.u32 256, 64
        %1207 = vbcast.lane.b32.xlu0 %v1204, %s1206
        %v1208 = vpop.permute.xlu0 %1207
        %v1209 = vlaneseq
        %v1210 = vshrl.u32 %v1209, 7
        %v1211 = vsub.s32 7, %v1210
        %v1212 = vrot.slane %v301, %v1211
        %s1214 = sor.u32 256, 64
        %1215 = vbcast.lane.b32.xlu0 %v1212, %s1214
        %v1216 = vpop.permute.xlu0 %1215
        %v1225 = vadd.f32 %v1130, %v1160
        %v1226 = vadd.f32 %v1133, %v1168
        %v1227 = vadd.f32 %v1136, %v1176
        %v1228 = vadd.f32 %v1139, %v1184
        %v1229 = vadd.f32 %v1142, %v1192
        %v1230 = vadd.f32 %v1145, %v1200
        %v1231 = vadd.f32 %v1148, %v1208
        %v1232 = vadd.f32 %v1151, %v1216
        %s1233 = smul.u32 %s27, 8
        %v1234 = vlaneseq
        %v1235 = vshrl.u32 %v1234, 7
        %v1236 = vstv %s1233
        %v1237 = vadd.s32 %v1236, %v1235
        %vm1238 = vcmp.lt.s32.totalorder %v1237, 2
        %1247 = vset.pattern.permute.xlu0 0
        %1248 = vperm.xlu0 %1247, %v1225
        %v1249 = vpop.permute.xlu0 %1248
        %1250 = vset.pattern.permute.xlu0 0
        %1251 = vperm.xlu0 %1250, %v1226
        %v1252 = vpop.permute.xlu0 %1251
        %1253 = vset.pattern.permute.xlu0 0
        %1254 = vperm.xlu0 %1253, %v1227
        %v1255 = vpop.permute.xlu0 %1254
        %1256 = vset.pattern.permute.xlu0 0
        %1257 = vperm.xlu0 %1256, %v1228
        %v1258 = vpop.permute.xlu0 %1257
        %1259 = vset.pattern.permute.xlu0 0
        %1260 = vperm.xlu0 %1259, %v1229
        %v1261 = vpop.permute.xlu0 %1260
        %1262 = vset.pattern.permute.xlu0 0
        %1263 = vperm.xlu0 %1262, %v1230
        %v1264 = vpop.permute.xlu0 %1263
        %1265 = vset.pattern.permute.xlu0 0
        %1266 = vperm.xlu0 %1265, %v1231
        %v1267 = vpop.permute.xlu0 %1266
        %1268 = vset.pattern.permute.xlu0 0
        %1269 = vperm.xlu0 %1268, %v1232
        %v1270 = vpop.permute.xlu0 %1269
        %v1271 = vlaneseq
        %v1272 = vand.u32 %v1271, 127
        %v1273 = vadd.s32 %v1272, 4294967288
        %v1274 = vlaneseq
        %v1275 = vshrl.u32 %v1274, 7
        %v1276 = vsub.s32 %v1273, %v1275
        %v1277 = vrot.slane %v1249, %v1276
        %v1278 = vlaneseq
        %v1279 = vshrl.u32 %v1278, 7
        %v1280 = vsub.s32 %v1273, %v1279
        %v1281 = vrot.slane %v1252, %v1280
        %v1282 = vlaneseq
        %v1283 = vshrl.u32 %v1282, 7
        %v1284 = vsub.s32 %v1273, %v1283
        %v1285 = vrot.slane %v1255, %v1284
        %v1286 = vlaneseq
        %v1287 = vshrl.u32 %v1286, 7
        %v1288 = vsub.s32 %v1273, %v1287
        %v1289 = vrot.slane %v1258, %v1288
        %v1290 = vlaneseq
        %v1291 = vshrl.u32 %v1290, 7
        %v1292 = vsub.s32 %v1273, %v1291
        %v1293 = vrot.slane %v1261, %v1292
        %v1294 = vlaneseq
        %v1295 = vshrl.u32 %v1294, 7
        %v1296 = vsub.s32 %v1273, %v1295
        %v1297 = vrot.slane %v1264, %v1296
        %v1298 = vlaneseq
        %v1299 = vshrl.u32 %v1298, 7
        %v1300 = vsub.s32 %v1273, %v1299
        %v1301 = vrot.slane %v1267, %v1300
        %v1302 = vlaneseq
        %v1303 = vshrl.u32 %v1302, 7
        %v1304 = vsub.s32 %v1273, %v1303
        %v1305 = vrot.slane %v1270, %v1304
        %v1306 = vsel %vm456, %v1281, %v1277
        %v1307 = vsel %vm458, %v1285, %v1306
        %v1308 = vsel %vm460, %v1289, %v1307
        %v1309 = vsel %vm462, %v1293, %v1308
        %v1310 = vsel %vm464, %v1297, %v1309
        %v1311 = vsel %vm466, %v1301, %v1310
        %v1312 = vsel %vm468, %v1305, %v1311
        %v1314 = vsel %vm1238, %v299, %v1312
        %1316 = vrot.lane.b32.xlu0 %v1314, 120
        %v1317 = vpop.permute.xlu0 %1316
        %1319 = vrot.lane.b32.xlu0 %v984, 36
        %v1320 = vpop.permute.xlu0 %1319
        %1322 = vrot.lane.b32.xlu0 %v978, 4
        %v1323 = vpop.permute.xlu0 %1322
        %vm1325 = vcmask 31744
        %v1326 = vsel %vm1325, %v1317, %v1320
        %vm1327 = vcmask 293888
        %v1328 = vsel %vm1327, %v1326, %v1323
        %vm1329 = vcmask 556032
        %v1330 = vsel %vm1329, %v1328, 0.0
        %1331 = vst [vmem:[%s296] sm:$0xff] %v1330
        %s1332 = sand.u32 %s151, 1
        %s1333 = scalar_lea.sflag [#allocation6], %s1332
        %s1334 = sand.u32 %s151, 1
        %s1335 = smul.addr %s1334, 8
        %s1336 = scalar_lea.vmem [#allocation12], %s1335
        // Predicated region
        $region57: #{tpu_custom_call.1} parent=35 // pred_check
          %p1337 = pneg %p161
        $region58: #{tpu_custom_call.1} parent=35 // pred_check_branch
          %1339 = sbr.rel (%p1337) target = $region60
        $region59: #{tpu_custom_call.1} parent=35 // pred_region
          %s1341 = ssub.s32 128, 128
          %1342 = vsyncadd %s1333, %s1341
          %s1343 = sadd.s32 %s27, %s28
          %s1344 = smul.addr %s1343, 128
          %s1345 = scalar_lea.hbm %s4, %s1344
          %s1347 = sshll.u32 %s1336, 4
          %s1348 = int_to_ptr.vmem [resolvable:$true] %s1347
          %1350 = dma.vmem_to_hbm [thread:$0]  %s1348, 128, %s1345, %s1333
        $region60: #{tpu_custom_call.1} parent=35 // pred_fallthru
          _
      $region36: #{tpu_custom_call.1} parent=5 // pred_fallthru
        _
      %p1351 = scmp.le.s32.totalorder 2, %s18
      // Predicated region
      $region61: #{tpu_custom_call.1} parent=5 // pred_check
        %p1352 = pneg %p1351
      $region62: #{tpu_custom_call.1} parent=5 // pred_check_branch
        %1354 = sbr.rel (%p1352) target = $region64
      $region63: #{tpu_custom_call.1} parent=5 // pred_region
        %s1355 = ssub.s32 %s18, 2
        // Predicated region
        $region65: #{tpu_custom_call.1} parent=63 // pred_check
          %p1356 = pneg %p167
        $region66: #{tpu_custom_call.1} parent=63 // pred_check_branch
          %1358 = sbr.rel (%p1356) target = $region68
        $region67: #{tpu_custom_call.1} parent=63 // pred_region
          %s1359 = sand.u32 %s152, 1
          %s1360 = scalar_lea.sflag [#allocation6], %s1359
          %s1361 = sand.u32 %s152, 1
          %s1362 = smul.addr %s1361, 8
          %s1363 = scalar_lea.vmem [#allocation12], %s1362
          %1364 = dma.done %s1360, 128
        $region68: #{tpu_custom_call.1} parent=63 // pred_fallthru
          _
      $region64: #{tpu_custom_call.1} parent=5 // pred_fallthru
        _
    $region6: #{tpu_custom_call.1} parent=1 // loop_footer
      %s22 = sadd.s32 1, %s18
    $region7: #{tpu_custom_call.1} parent=1 // loop_footer_branch
      %17 = sbr.rel target = $region3
    $region8: #{tpu_custom_call.1} parent=1 // loop_exit
      _
    %1365 = vsyncpa [#allocation5], 1
    %s1366 = scalar_lea.sflag [#allocation5], 1
    %1367 = vsyncpa %s1366, 1
    %1368 = vsyncpa [#allocation8], 1
    %1369 = vsyncpa [#allocation11], 1
    %1370 = vsyncpa [#allocation6], 1
    %s1371 = scalar_lea.sflag [#allocation6], 1
    %1372 = vsyncpa %s1371, 1

</llo_original>
